<compile_context>
chip_gen: v7x
topology: tpu7x:2x2x1
jax: 0.10.0
libtpu: 0.0.40
codegen_flags: <defaults>
</compile_context>

<pallas_src>
import functools

import jax
import jax.numpy as jnp
from jax import lax
from jax.experimental import pallas as pl
from jax.experimental.pallas import tpu as pltpu

_SQRT2 = 1.4142135623730951
_LN_EPS = 1e-5


def _gelu(x):
    # exact (erf-based) GELU, matching torch.nn.GELU() default
    return 0.5 * x * (1.0 + lax.erf(x / _SQRT2))


def _layernorm(x, gamma, beta):
    mu = jnp.mean(x, axis=-1, keepdims=True)
    var = jnp.mean((x - mu) ** 2, axis=-1, keepdims=True)
    return (x - mu) * lax.rsqrt(var + _LN_EPS) * gamma + beta


def _te_kernel(num_treatments, hidden_dim, half_dim, matmul_dtype,
               # inputs
               z_ref, wall_ref, ball_ref,
               bg1_ref, bbt1_ref, bw2_ref, bb2_ref, bw3_ref, bb3_ref,
               cg1_ref, cbt1_ref, cw2_ref, cb2_ref,
               eg_ref, ebt_ref, ew2_ref, eb2_ref,
               uw2_ref, ub2_ref,
               # outputs
               out_ref, unc_ref, probs_ref):
    T, H, H2 = num_treatments, hidden_dim, half_dim
    md = matmul_dtype
    z = z_ref[...]  # (TILE_B, H)

    # ---- single fused first-layer matmul for everything that consumes z
    fused = (jnp.dot(z.astype(md), wall_ref[...],
                     preferred_element_type=jnp.float32) + ball_ref[...])

    hb = fused[:, 0:H]                      # baseline L1
    hc = fused[:, H:2 * H]                  # classifier L1
    hu = fused[:, 2 * H:2 * H + H2]         # uncertainty L1
    eoff = 2 * H + H2                       # effect-net L1 chunks start here

    # ---- baseline: LN -> GELU -> Linear -> GELU -> (mul+reduce head)
    hb = _gelu(_layernorm(hb, bg1_ref[...], bbt1_ref[...]))
    hb2 = _gelu(jnp.dot(hb.astype(md), bw2_ref[...],
                        preferred_element_type=jnp.float32) + bb2_ref[...])
    baseline = jnp.sum(hb2 * bw3_ref[...], axis=-1, keepdims=True) + bb3_ref[...]

    # ---- treatment classifier: LN -> GELU -> Linear -> softmax
    hc = _gelu(_layernorm(hc, cg1_ref[...], cbt1_ref[...]))
    logits = (jnp.dot(hc.astype(md), cw2_ref[...],
                      preferred_element_type=jnp.float32) + cb2_ref[...])
    m = jnp.max(logits, axis=-1, keepdims=True)
    e = jnp.exp(logits - m)
    probs_ref[...] = e / jnp.sum(e, axis=-1, keepdims=True)

    # ---- uncertainty: GELU -> (mul+reduce head) -> exp
    hu = _gelu(hu)
    unc = jnp.exp(jnp.sum(hu * uw2_ref[...], axis=-1, keepdims=True) + ub2_ref[...])

    # ---- effect nets: per-treatment LN/GELU on H2-wide chunks of the fused
    #      matmul result, then mul+reduce heads; assemble all columns once.
    cols = [baseline]
    for t in range(1, T):
        i = t - 1
        he = fused[:, eoff + i * H2: eoff + (i + 1) * H2]
        he = _gelu(_layernorm(he, eg_ref[i:i + 1, :], ebt_ref[i:i + 1, :]))
        eff = (jnp.sum(he * ew2_ref[i:i + 1, :], axis=-1, keepdims=True)
               + eb2_ref[:, i:i + 1])
        cols.append(baseline + eff)

    # lane-dense single stores (no per-column masked writes)
    out_ref[...] = jnp.concatenate(cols, axis=-1)
    unc_ref[...] = jnp.broadcast_to(unc, unc_ref.shape)


def _round_up8(x):
    return -(-x // 8) * 8


def treatment_effect_forward(z, params, num_treatments, *, tile_b=None,
                             matmul_dtype=jnp.float32):
    """Pallas forward. Returns (outcomes [B,T,1], uncertainties [B,T,1], probs [B,T])."""
    assert num_treatments >= 2, "kernel requires num_treatments >= 2"
    B, H = z.shape
    H2 = H // 2
    T = num_treatments
    md = matmul_dtype

    if tile_b is None:
        tile_b = min(512, _round_up8(B))   # TODO(synk): re-derive cap for v7x 64MiB VMEM at large H
    tile_b = min(tile_b, _round_up8(B))
    grid = (pl.cdiv(B, tile_b),)

    # ---- host-side fusion of all z-consuming first layers: [H, 2H+H2+(T-1)*H2]
    ew1_flat = jnp.transpose(params["ew1"], (1, 0, 2)).reshape(H, (T - 1) * H2)
    eb1_flat = params["eb1"].reshape(1, (T - 1) * H2)
    w_all = jnp.concatenate(
        [params["bw1"], params["cw1"], params["uw1"], ew1_flat], axis=1).astype(md)
    b_all = jnp.concatenate(
        [params["bb1"], params["cb1"], params["ub1"], eb1_flat],
        axis=1).astype(jnp.float32)

    bw2 = params["bw2"].astype(md)
    cw2 = params["cw2"].astype(md)
    bw3r = params["bw3"].reshape(1, H2)        # (H2,1) -> row, used as mul+reduce
    uw2r = params["uw2"].reshape(1, H2)
    ew2r = params["ew2"].reshape(T - 1, H2)
    eb2r = params["eb2"].reshape(1, T - 1)

    inputs = (
        z, w_all, b_all,
        params["bg1"], params["bbt1"], bw2, params["bb2"], bw3r, params["bb3"],
        params["cg1"], params["cbt1"], cw2, params["cb2"],
        params["eg"], params["ebt"], ew2r, eb2r,
        uw2r, params["ub2"],
    )

    # z is batch-tiled; every parameter is a full-array block with a constant
    # index_map so it stays resident in VMEM across the grid.
    def resident(a):
        return pl.BlockSpec(a.shape, lambda i: (0, 0))

    in_specs = ([pl.BlockSpec((tile_b, H), lambda i: (i, 0))]
                + [resident(a) for a in inputs[1:]])
    out_specs = (pl.BlockSpec((tile_b, T), lambda i: (i, 0)),) * 3
    out_shapes = (jax.ShapeDtypeStruct((B, T), jnp.float32),) * 3

    # advisory cost hint for XLA scheduling
    n_all = int(w_all.shape[1])
    flops = 2 * B * H * n_all + 2 * B * H * H2 + 2 * B * H * T \
        + 10 * B * (2 * H + (T + 1) * H2 + T)
    trans = B * (2 * H + T * H2 + 2 * T)
    param_bytes = sum(int(a.size) * int(a.dtype.itemsize) for a in inputs[1:])
    bytes_accessed = int(z.size) * int(z.dtype.itemsize) + param_bytes + 3 * B * T * 4
    ce = pl.CostEstimate(flops=int(flops), transcendentals=int(trans),
                         bytes_accessed=int(bytes_accessed))

    kernel = functools.partial(_te_kernel, T, H, H2, md)
    outcomes, uncertainties, probs = pl.pallas_call(
        kernel,
        out_shape=out_shapes,
        grid=grid,
        in_specs=in_specs,
        out_specs=out_specs,
        compiler_params=pltpu.CompilerParams(
            dimension_semantics=("parallel",),
            vmem_limit_bytes=32 * 1024 * 1024,
        ),
        cost_estimate=ce,
    )(*inputs)

    return outcomes[:, :, None], uncertainties[:, :, None], probs


# ---------------------------------------------------------------------------
# deterministic parameter construction (PyTorch-style shapes; linear weights
# stored pre-transposed as [in, out])
# ---------------------------------------------------------------------------
def make_params(key, hidden_dim, num_treatments):
    assert num_treatments >= 2, "num_treatments >= 2 required (see module spec)"
    H, H2, T = hidden_dim, hidden_dim // 2, num_treatments
    keys = iter(jax.random.split(key, 64))

    def lin(k, fan_in, fan_out):
        bound = 1.0 / jnp.sqrt(fan_in)
        kw, kb = jax.random.split(k)
        W = jax.random.uniform(kw, (fan_in, fan_out), jnp.float32, -bound, bound)
        b = jax.random.uniform(kb, (1, fan_out), jnp.float32, -bound, bound)
        return W, b

    p = {}
    # baseline network
    p["bw1"], p["bb1"] = lin(next(keys), H, H)
    p["bg1"] = jnp.ones((1, H), jnp.float32)
    p["bbt1"] = jnp.zeros((1, H), jnp.float32)
    p["bw2"], p["bb2"] = lin(next(keys), H, H2)
    p["bw3"], p["bb3"] = lin(next(keys), H2, 1)
    # treatment classifier
    p["cw1"], p["cb1"] = lin(next(keys), H, H)
    p["cg1"] = jnp.ones((1, H), jnp.float32)
    p["cbt1"] = jnp.zeros((1, H), jnp.float32)
    p["cw2"], p["cb2"] = lin(next(keys), H, T)
    # stacked effect networks (T-1 of them)
    ew1, eb1, ew2, eb2 = [], [], [], []
    for _ in range(T - 1):
        w1, b1 = lin(next(keys), H, H2)
        w2, b2 = lin(next(keys), H2, 1)
        ew1.append(w1); eb1.append(b1[0]); ew2.append(w2); eb2.append(b2[0])
    p["ew1"] = jnp.stack(ew1)                       # (T-1, H, H2)
    p["eb1"] = jnp.stack(eb1)                       # (T-1, H2)
    p["eg"] = jnp.ones((T - 1, H2), jnp.float32)
    p["ebt"] = jnp.zeros((T - 1, H2), jnp.float32)
    p["ew2"] = jnp.stack(ew2)                       # (T-1, H2, 1)
    p["eb2"] = jnp.stack(eb2)                       # (T-1, 1)
    # uncertainty network
    p["uw1"], p["ub1"] = lin(next(keys), H, H2)
    p["uw2"], p["ub2"] = lin(next(keys), H2, 1)
    return p


# pure-JAX reference (mirrors the PyTorch forward) for a correctness check
def reference_forward(z, p, T):
    def gelu(x):
        return 0.5 * x * (1.0 + lax.erf(x / _SQRT2))

    def ln(x, g, b):
        mu = jnp.mean(x, axis=-1, keepdims=True)
        var = jnp.mean((x - mu) ** 2, axis=-1, keepdims=True)
        return (x - mu) / jnp.sqrt(var + _LN_EPS) * g + b

    h = gelu(ln(z @ p["bw1"] + p["bb1"], p["bg1"], p["bbt1"]))
    h = gelu(h @ p["bw2"] + p["bb2"])
    baseline = h @ p["bw3"] + p["bb3"]

    c = gelu(ln(z @ p["cw1"] + p["cb1"], p["cg1"], p["cbt1"]))
    probs = jax.nn.softmax(c @ p["cw2"] + p["cb2"], axis=1)

    u = gelu(z @ p["uw1"] + p["ub1"])
    unc = jnp.exp(u @ p["uw2"] + p["ub2"])

    outs, uncs = [baseline], [unc]
    for t in range(1, T):
        i = t - 1
        eh = gelu(ln(z @ p["ew1"][i] + p["eb1"][i:i + 1], p["eg"][i:i + 1],
                     p["ebt"][i:i + 1]))
        eff = eh @ p["ew2"][i] + p["eb2"][i:i + 1]
        outs.append(baseline + eff)
        uncs.append(unc)
    return jnp.stack(outs, axis=1), jnp.stack(uncs, axis=1), probs


if __name__ == "__main__":
    B, H, T = 16, 32, 4
    key = jax.random.PRNGKey(0)
    kz, kp = jax.random.split(key)
    z = jax.random.normal(kz, (B, H), jnp.float32)
    params = make_params(kp, H, T)

    # tile_b=8 so the batch grid actually has 2 steps (exercises pipelining).
    outcomes, uncertainties, probs = treatment_effect_forward(
        z, params, T, tile_b=8, matmul_dtype=jnp.float32)
    jax.block_until_ready((outcomes, uncertainties, probs))

    ref_o, ref_u, ref_p = reference_forward(z, params, T)
    assert outcomes.shape == (B, T, 1)
    assert uncertainties.shape == (B, T, 1)
    assert probs.shape == (B, T)
    assert jnp.allclose(outcomes, ref_o, atol=1e-5, rtol=1e-5)
    assert jnp.allclose(uncertainties, ref_u, atol=1e-5, rtol=1e-5)
    assert jnp.allclose(probs, ref_p, atol=1e-5, rtol=1e-5)
    print("KERNEL_OK")
</pallas_src>

<mosaic_0001>
module attributes {stable_mosaic.version = 11 : i64} {
  func.func @_te_kernel(%arg0: i32, %arg1: memref<8x32xf32, #tpu.memory_space<vmem>>, %arg2: memref<32x128xf32, #tpu.memory_space<vmem>>, %arg3: memref<1x128xf32, #tpu.memory_space<vmem>>, %arg4: memref<1x32xf32, #tpu.memory_space<vmem>>, %arg5: memref<1x32xf32, #tpu.memory_space<vmem>>, %arg6: memref<32x16xf32, #tpu.memory_space<vmem>>, %arg7: memref<1x16xf32, #tpu.memory_space<vmem>>, %arg8: memref<1x16xf32, #tpu.memory_space<vmem>>, %arg9: memref<1x1xf32, #tpu.memory_space<vmem>>, %arg10: memref<1x32xf32, #tpu.memory_space<vmem>>, %arg11: memref<1x32xf32, #tpu.memory_space<vmem>>, %arg12: memref<32x4xf32, #tpu.memory_space<vmem>>, %arg13: memref<1x4xf32, #tpu.memory_space<vmem>>, %arg14: memref<3x16xf32, #tpu.memory_space<vmem>>, %arg15: memref<3x16xf32, #tpu.memory_space<vmem>>, %arg16: memref<3x16xf32, #tpu.memory_space<vmem>>, %arg17: memref<1x3xf32, #tpu.memory_space<vmem>>, %arg18: memref<1x16xf32, #tpu.memory_space<vmem>>, %arg19: memref<1x1xf32, #tpu.memory_space<vmem>>, %arg20: memref<8x4xf32, #tpu.memory_space<vmem>>, %arg21: memref<8x4xf32, #tpu.memory_space<vmem>>, %arg22: memref<8x4xf32, #tpu.memory_space<vmem>>) attributes {dimension_semantics = [#tpu.dimension_semantics<parallel>], iteration_bounds = array<i64: 2>, scalar_prefetch = 0 : i64, scratch_operands = 0 : i64, tpu.core_type = #tpu.core_type<tc>, window_params = [{transform_indices = @transform_0, window_bounds = array<i64: 8, 32>}, {pipeline_mode = #tpu.pipeline_mode<synchronous>, transform_indices = @transform_1, window_bounds = array<i64: 32, 128>}, {pipeline_mode = #tpu.pipeline_mode<synchronous>, transform_indices = @transform_2, window_bounds = array<i64: 1, 128>}, {pipeline_mode = #tpu.pipeline_mode<synchronous>, transform_indices = @transform_3, window_bounds = array<i64: 1, 32>}, {pipeline_mode = #tpu.pipeline_mode<synchronous>, transform_indices = @transform_4, window_bounds = array<i64: 1, 32>}, {pipeline_mode = #tpu.pipeline_mode<synchronous>, transform_indices = @transform_5, window_bounds = array<i64: 32, 16>}, {pipeline_mode = #tpu.pipeline_mode<synchronous>, transform_indices = @transform_6, window_bounds = array<i64: 1, 16>}, {pipeline_mode = #tpu.pipeline_mode<synchronous>, transform_indices = @transform_7, window_bounds = array<i64: 1, 16>}, {pipeline_mode = #tpu.pipeline_mode<synchronous>, transform_indices = @transform_8, window_bounds = array<i64: 1, 1>}, {pipeline_mode = #tpu.pipeline_mode<synchronous>, transform_indices = @transform_9, window_bounds = array<i64: 1, 32>}, {pipeline_mode = #tpu.pipeline_mode<synchronous>, transform_indices = @transform_10, window_bounds = array<i64: 1, 32>}, {pipeline_mode = #tpu.pipeline_mode<synchronous>, transform_indices = @transform_11, window_bounds = array<i64: 32, 4>}, {pipeline_mode = #tpu.pipeline_mode<synchronous>, transform_indices = @transform_12, window_bounds = array<i64: 1, 4>}, {pipeline_mode = #tpu.pipeline_mode<synchronous>, transform_indices = @transform_13, window_bounds = array<i64: 3, 16>}, {pipeline_mode = #tpu.pipeline_mode<synchronous>, transform_indices = @transform_14, window_bounds = array<i64: 3, 16>}, {pipeline_mode = #tpu.pipeline_mode<synchronous>, transform_indices = @transform_15, window_bounds = array<i64: 3, 16>}, {pipeline_mode = #tpu.pipeline_mode<synchronous>, transform_indices = @transform_16, window_bounds = array<i64: 1, 3>}, {pipeline_mode = #tpu.pipeline_mode<synchronous>, transform_indices = @transform_17, window_bounds = array<i64: 1, 16>}, {pipeline_mode = #tpu.pipeline_mode<synchronous>, transform_indices = @transform_18, window_bounds = array<i64: 1, 1>}, {transform_indices = @transform_19, window_bounds = array<i64: 8, 4>}, {transform_indices = @transform_20, window_bounds = array<i64: 8, 4>}, {transform_indices = @transform_21, window_bounds = array<i64: 8, 4>}]} {
    %c0 = arith.constant 0 : index
    %c0_0 = arith.constant 0 : index
    %0 = vector.load %arg1[%c0, %c0_0] : memref<8x32xf32, #tpu.memory_space<vmem>>, vector<8x32xf32>
    %c0_1 = arith.constant 0 : index
    %c0_2 = arith.constant 0 : index
    %1 = vector.load %arg2[%c0_1, %c0_2] : memref<32x128xf32, #tpu.memory_space<vmem>>, vector<32x128xf32>
    %cst = arith.constant dense<0.000000e+00> : vector<8x128xf32>
    %2 = tpu.matmul %0, %1, %cst {dimension_numbers = #tpu.dot_dimension_numbers<[1], [0], [0], [1], [0, 0, 1, 1], [], []>} : vector<8x32xf32>, vector<32x128xf32>, vector<8x128xf32> -> vector<8x128xf32>
    %c0_3 = arith.constant 0 : index
    %c0_4 = arith.constant 0 : index
    %3 = vector.load %arg3[%c0_3, %c0_4] : memref<1x128xf32, #tpu.memory_space<vmem>>, vector<1x128xf32>
    %4 = vector.broadcast %3 : vector<1x128xf32> to vector<8x128xf32>
    %5 = arith.addf %2, %4 : vector<8x128xf32>
    %6 = vector.extract_strided_slice %5 {offsets = [0, 0], sizes = [8, 32], strides = [1, 1]} : vector<8x128xf32> to vector<8x32xf32>
    %7 = vector.extract_strided_slice %5 {offsets = [0, 32], sizes = [8, 32], strides = [1, 1]} : vector<8x128xf32> to vector<8x32xf32>
    %8 = vector.extract_strided_slice %5 {offsets = [0, 64], sizes = [8, 16], strides = [1, 1]} : vector<8x128xf32> to vector<8x16xf32>
    %c0_5 = arith.constant 0 : index
    %c0_6 = arith.constant 0 : index
    %9 = vector.load %arg4[%c0_5, %c0_6] : memref<1x32xf32, #tpu.memory_space<vmem>>, vector<1x32xf32>
    %c0_7 = arith.constant 0 : index
    %c0_8 = arith.constant 0 : index
    %10 = vector.load %arg5[%c0_7, %c0_8] : memref<1x32xf32, #tpu.memory_space<vmem>>, vector<1x32xf32>
    %cst_9 = arith.constant dense<0.000000e+00> : vector<8xf32>
    %11 = vector.multi_reduction <add>, %6, %cst_9 [1] : vector<8x32xf32> to vector<8xf32>
    %12 = vector.shape_cast %11 : vector<8xf32> to vector<8x1xf32>
    %cst_10 = arith.constant 3.200000e+01 : f32
    %13 = vector.broadcast %cst_10 : f32 to vector<8x1xf32>
    %14 = arith.divf %12, %13 : vector<8x1xf32>
    %15 = vector.broadcast %14 : vector<8x1xf32> to vector<8x32xf32>
    %16 = arith.subf %6, %15 : vector<8x32xf32>
    %17 = arith.mulf %16, %16 : vector<8x32xf32>
    %cst_11 = arith.constant dense<0.000000e+00> : vector<8xf32>
    %18 = vector.multi_reduction <add>, %17, %cst_11 [1] : vector<8x32xf32> to vector<8xf32>
    %19 = vector.shape_cast %18 : vector<8xf32> to vector<8x1xf32>
    %cst_12 = arith.constant 3.200000e+01 : f32
    %20 = vector.broadcast %cst_12 : f32 to vector<8x1xf32>
    %21 = arith.divf %19, %20 : vector<8x1xf32>
    %22 = vector.broadcast %14 : vector<8x1xf32> to vector<8x32xf32>
    %23 = arith.subf %6, %22 : vector<8x32xf32>
    %cst_13 = arith.constant 9.99999974E-6 : f32
    %24 = vector.broadcast %cst_13 : f32 to vector<8x1xf32>
    %25 = arith.addf %21, %24 : vector<8x1xf32>
    %26 = math.rsqrt %25 : vector<8x1xf32>
    %27 = vector.broadcast %26 : vector<8x1xf32> to vector<8x32xf32>
    %28 = arith.mulf %23, %27 : vector<8x32xf32>
    %29 = vector.broadcast %9 : vector<1x32xf32> to vector<8x32xf32>
    %30 = arith.mulf %28, %29 : vector<8x32xf32>
    %31 = vector.broadcast %10 : vector<1x32xf32> to vector<8x32xf32>
    %32 = arith.addf %30, %31 : vector<8x32xf32>
    %cst_14 = arith.constant 5.000000e-01 : f32
    %33 = vector.broadcast %cst_14 : f32 to vector<8x32xf32>
    %34 = arith.mulf %33, %32 : vector<8x32xf32>
    %cst_15 = arith.constant 1.41421354 : f32
    %35 = vector.broadcast %cst_15 : f32 to vector<8x32xf32>
    %36 = arith.divf %32, %35 : vector<8x32xf32>
    %37 = math.erf %36 : vector<8x32xf32>
    %cst_16 = arith.constant 1.000000e+00 : f32
    %38 = vector.broadcast %cst_16 : f32 to vector<8x32xf32>
    %39 = arith.addf %38, %37 : vector<8x32xf32>
    %40 = arith.mulf %34, %39 : vector<8x32xf32>
    %c0_17 = arith.constant 0 : index
    %c0_18 = arith.constant 0 : index
    %41 = vector.load %arg6[%c0_17, %c0_18] : memref<32x16xf32, #tpu.memory_space<vmem>>, vector<32x16xf32>
    %cst_19 = arith.constant dense<0.000000e+00> : vector<8x16xf32>
    %42 = tpu.matmul %40, %41, %cst_19 {dimension_numbers = #tpu.dot_dimension_numbers<[1], [0], [0], [1], [0, 0, 1, 1], [], []>} : vector<8x32xf32>, vector<32x16xf32>, vector<8x16xf32> -> vector<8x16xf32>
    %c0_20 = arith.constant 0 : index
    %c0_21 = arith.constant 0 : index
    %43 = vector.load %arg7[%c0_20, %c0_21] : memref<1x16xf32, #tpu.memory_space<vmem>>, vector<1x16xf32>
    %44 = vector.broadcast %43 : vector<1x16xf32> to vector<8x16xf32>
    %45 = arith.addf %42, %44 : vector<8x16xf32>
    %cst_22 = arith.constant 5.000000e-01 : f32
    %46 = vector.broadcast %cst_22 : f32 to vector<8x16xf32>
    %47 = arith.mulf %46, %45 : vector<8x16xf32>
    %cst_23 = arith.constant 1.41421354 : f32
    %48 = vector.broadcast %cst_23 : f32 to vector<8x16xf32>
    %49 = arith.divf %45, %48 : vector<8x16xf32>
    %50 = math.erf %49 : vector<8x16xf32>
    %cst_24 = arith.constant 1.000000e+00 : f32
    %51 = vector.broadcast %cst_24 : f32 to vector<8x16xf32>
    %52 = arith.addf %51, %50 : vector<8x16xf32>
    %53 = arith.mulf %47, %52 : vector<8x16xf32>
    %c0_25 = arith.constant 0 : index
    %c0_26 = arith.constant 0 : index
    %54 = vector.load %arg8[%c0_25, %c0_26] : memref<1x16xf32, #tpu.memory_space<vmem>>, vector<1x16xf32>
    %55 = vector.broadcast %54 : vector<1x16xf32> to vector<8x16xf32>
    %56 = arith.mulf %53, %55 : vector<8x16xf32>
    %cst_27 = arith.constant dense<0.000000e+00> : vector<8xf32>
    %57 = vector.multi_reduction <add>, %56, %cst_27 [1] : vector<8x16xf32> to vector<8xf32>
    %58 = vector.shape_cast %57 : vector<8xf32> to vector<8x1xf32>
    %c0_28 = arith.constant 0 : index
    %c0_29 = arith.constant 0 : index
    %59 = vector.load %arg9[%c0_28, %c0_29] : memref<1x1xf32, #tpu.memory_space<vmem>>, vector<1x1xf32>
    %60 = vector.broadcast %59 : vector<1x1xf32> to vector<8x1xf32>
    %61 = arith.addf %58, %60 : vector<8x1xf32>
    %c0_30 = arith.constant 0 : index
    %c0_31 = arith.constant 0 : index
    %62 = vector.load %arg10[%c0_30, %c0_31] : memref<1x32xf32, #tpu.memory_space<vmem>>, vector<1x32xf32>
    %c0_32 = arith.constant 0 : index
    %c0_33 = arith.constant 0 : index
    %63 = vector.load %arg11[%c0_32, %c0_33] : memref<1x32xf32, #tpu.memory_space<vmem>>, vector<1x32xf32>
    %cst_34 = arith.constant dense<0.000000e+00> : vector<8xf32>
    %64 = vector.multi_reduction <add>, %7, %cst_34 [1] : vector<8x32xf32> to vector<8xf32>
    %65 = vector.shape_cast %64 : vector<8xf32> to vector<8x1xf32>
    %cst_35 = arith.constant 3.200000e+01 : f32
    %66 = vector.broadcast %cst_35 : f32 to vector<8x1xf32>
    %67 = arith.divf %65, %66 : vector<8x1xf32>
    %68 = vector.broadcast %67 : vector<8x1xf32> to vector<8x32xf32>
    %69 = arith.subf %7, %68 : vector<8x32xf32>
    %70 = arith.mulf %69, %69 : vector<8x32xf32>
    %cst_36 = arith.constant dense<0.000000e+00> : vector<8xf32>
    %71 = vector.multi_reduction <add>, %70, %cst_36 [1] : vector<8x32xf32> to vector<8xf32>
    %72 = vector.shape_cast %71 : vector<8xf32> to vector<8x1xf32>
    %cst_37 = arith.constant 3.200000e+01 : f32
    %73 = vector.broadcast %cst_37 : f32 to vector<8x1xf32>
    %74 = arith.divf %72, %73 : vector<8x1xf32>
    %75 = vector.broadcast %67 : vector<8x1xf32> to vector<8x32xf32>
    %76 = arith.subf %7, %75 : vector<8x32xf32>
    %cst_38 = arith.constant 9.99999974E-6 : f32
    %77 = vector.broadcast %cst_38 : f32 to vector<8x1xf32>
    %78 = arith.addf %74, %77 : vector<8x1xf32>
    %79 = math.rsqrt %78 : vector<8x1xf32>
    %80 = vector.broadcast %79 : vector<8x1xf32> to vector<8x32xf32>
    %81 = arith.mulf %76, %80 : vector<8x32xf32>
    %82 = vector.broadcast %62 : vector<1x32xf32> to vector<8x32xf32>
    %83 = arith.mulf %81, %82 : vector<8x32xf32>
    %84 = vector.broadcast %63 : vector<1x32xf32> to vector<8x32xf32>
    %85 = arith.addf %83, %84 : vector<8x32xf32>
    %cst_39 = arith.constant 5.000000e-01 : f32
    %86 = vector.broadcast %cst_39 : f32 to vector<8x32xf32>
    %87 = arith.mulf %86, %85 : vector<8x32xf32>
    %cst_40 = arith.constant 1.41421354 : f32
    %88 = vector.broadcast %cst_40 : f32 to vector<8x32xf32>
    %89 = arith.divf %85, %88 : vector<8x32xf32>
    %90 = math.erf %89 : vector<8x32xf32>
    %cst_41 = arith.constant 1.000000e+00 : f32
    %91 = vector.broadcast %cst_41 : f32 to vector<8x32xf32>
    %92 = arith.addf %91, %90 : vector<8x32xf32>
    %93 = arith.mulf %87, %92 : vector<8x32xf32>
    %c0_42 = arith.constant 0 : index
    %c0_43 = arith.constant 0 : index
    %94 = vector.load %arg12[%c0_42, %c0_43] : memref<32x4xf32, #tpu.memory_space<vmem>>, vector<32x4xf32>
    %cst_44 = arith.constant dense<0.000000e+00> : vector<8x4xf32>
    %95 = tpu.matmul %93, %94, %cst_44 {dimension_numbers = #tpu.dot_dimension_numbers<[1], [0], [0], [1], [0, 0, 1, 1], [], []>} : vector<8x32xf32>, vector<32x4xf32>, vector<8x4xf32> -> vector<8x4xf32>
    %c0_45 = arith.constant 0 : index
    %c0_46 = arith.constant 0 : index
    %96 = vector.load %arg13[%c0_45, %c0_46] : memref<1x4xf32, #tpu.memory_space<vmem>>, vector<1x4xf32>
    %97 = vector.broadcast %96 : vector<1x4xf32> to vector<8x4xf32>
    %98 = arith.addf %95, %97 : vector<8x4xf32>
    %cst_47 = arith.constant dense<0xFF800000> : vector<8xf32>
    %99 = vector.multi_reduction <maximumf>, %98, %cst_47 [1] : vector<8x4xf32> to vector<8xf32>
    %100 = vector.shape_cast %99 : vector<8xf32> to vector<8x1xf32>
    %101 = vector.broadcast %100 : vector<8x1xf32> to vector<8x4xf32>
    %102 = arith.subf %98, %101 : vector<8x4xf32>
    %103 = math.exp %102 : vector<8x4xf32>
    %cst_48 = arith.constant dense<0.000000e+00> : vector<8xf32>
    %104 = vector.multi_reduction <add>, %103, %cst_48 [1] : vector<8x4xf32> to vector<8xf32>
    %105 = vector.shape_cast %104 : vector<8xf32> to vector<8x1xf32>
    %106 = vector.broadcast %105 : vector<8x1xf32> to vector<8x4xf32>
    %107 = arith.divf %103, %106 : vector<8x4xf32>
    %c0_49 = arith.constant 0 : index
    %c0_50 = arith.constant 0 : index
    %108 = vector.load %arg22[%c0_49, %c0_50] : memref<8x4xf32, #tpu.memory_space<vmem>>, vector<8x4xf32>
    tpu.vector_store %arg22[%c0_49, %c0_50], %107 {strides = array<i32>} : memref<8x4xf32, #tpu.memory_space<vmem>>, vector<8x4xf32>,
    %cst_51 = arith.constant 5.000000e-01 : f32
    %109 = vector.broadcast %cst_51 : f32 to vector<8x16xf32>
    %110 = arith.mulf %109, %8 : vector<8x16xf32>
    %cst_52 = arith.constant 1.41421354 : f32
    %111 = vector.broadcast %cst_52 : f32 to vector<8x16xf32>
    %112 = arith.divf %8, %111 : vector<8x16xf32>
    %113 = math.erf %112 : vector<8x16xf32>
    %cst_53 = arith.constant 1.000000e+00 : f32
    %114 = vector.broadcast %cst_53 : f32 to vector<8x16xf32>
    %115 = arith.addf %114, %113 : vector<8x16xf32>
    %116 = arith.mulf %110, %115 : vector<8x16xf32>
    %c0_54 = arith.constant 0 : index
    %c0_55 = arith.constant 0 : index
    %117 = vector.load %arg18[%c0_54, %c0_55] : memref<1x16xf32, #tpu.memory_space<vmem>>, vector<1x16xf32>
    %118 = vector.broadcast %117 : vector<1x16xf32> to vector<8x16xf32>
    %119 = arith.mulf %116, %118 : vector<8x16xf32>
    %cst_56 = arith.constant dense<0.000000e+00> : vector<8xf32>
    %120 = vector.multi_reduction <add>, %119, %cst_56 [1] : vector<8x16xf32> to vector<8xf32>
    %121 = vector.shape_cast %120 : vector<8xf32> to vector<8x1xf32>
    %c0_57 = arith.constant 0 : index
    %c0_58 = arith.constant 0 : index
    %122 = vector.load %arg19[%c0_57, %c0_58] : memref<1x1xf32, #tpu.memory_space<vmem>>, vector<1x1xf32>
    %123 = vector.broadcast %122 : vector<1x1xf32> to vector<8x1xf32>
    %124 = arith.addf %121, %123 : vector<8x1xf32>
    %125 = math.exp %124 : vector<8x1xf32>
    %126 = vector.extract_strided_slice %5 {offsets = [0, 80], sizes = [8, 16], strides = [1, 1]} : vector<8x128xf32> to vector<8x16xf32>
    %c0_59 = arith.constant 0 : index
    %c0_60 = arith.constant 0 : index
    %127 = vector.load %arg14[%c0_59, %c0_60] : memref<3x16xf32, #tpu.memory_space<vmem>>, vector<1x16xf32>
    %c0_61 = arith.constant 0 : index
    %c0_62 = arith.constant 0 : index
    %128 = vector.load %arg15[%c0_61, %c0_62] : memref<3x16xf32, #tpu.memory_space<vmem>>, vector<1x16xf32>
    %cst_63 = arith.constant dense<0.000000e+00> : vector<8xf32>
    %129 = vector.multi_reduction <add>, %126, %cst_63 [1] : vector<8x16xf32> to vector<8xf32>
    %130 = vector.shape_cast %129 : vector<8xf32> to vector<8x1xf32>
    %cst_64 = arith.constant 1.600000e+01 : f32
    %131 = vector.broadcast %cst_64 : f32 to vector<8x1xf32>
    %132 = arith.divf %130, %131 : vector<8x1xf32>
    %133 = vector.broadcast %132 : vector<8x1xf32> to vector<8x16xf32>
    %134 = arith.subf %126, %133 : vector<8x16xf32>
    %135 = arith.mulf %134, %134 : vector<8x16xf32>
    %cst_65 = arith.constant dense<0.000000e+00> : vector<8xf32>
    %136 = vector.multi_reduction <add>, %135, %cst_65 [1] : vector<8x16xf32> to vector<8xf32>
    %137 = vector.shape_cast %136 : vector<8xf32> to vector<8x1xf32>
    %cst_66 = arith.constant 1.600000e+01 : f32
    %138 = vector.broadcast %cst_66 : f32 to vector<8x1xf32>
    %139 = arith.divf %137, %138 : vector<8x1xf32>
    %140 = vector.broadcast %132 : vector<8x1xf32> to vector<8x16xf32>
    %141 = arith.subf %126, %140 : vector<8x16xf32>
    %cst_67 = arith.constant 9.99999974E-6 : f32
    %142 = vector.broadcast %cst_67 : f32 to vector<8x1xf32>
    %143 = arith.addf %139, %142 : vector<8x1xf32>
    %144 = math.rsqrt %143 : vector<8x1xf32>
    %145 = vector.broadcast %144 : vector<8x1xf32> to vector<8x16xf32>
    %146 = arith.mulf %141, %145 : vector<8x16xf32>
    %147 = vector.broadcast %127 : vector<1x16xf32> to vector<8x16xf32>
    %148 = arith.mulf %146, %147 : vector<8x16xf32>
    %149 = vector.broadcast %128 : vector<1x16xf32> to vector<8x16xf32>
    %150 = arith.addf %148, %149 : vector<8x16xf32>
    %cst_68 = arith.constant 5.000000e-01 : f32
    %151 = vector.broadcast %cst_68 : f32 to vector<8x16xf32>
    %152 = arith.mulf %151, %150 : vector<8x16xf32>
    %cst_69 = arith.constant 1.41421354 : f32
    %153 = vector.broadcast %cst_69 : f32 to vector<8x16xf32>
    %154 = arith.divf %150, %153 : vector<8x16xf32>
    %155 = math.erf %154 : vector<8x16xf32>
    %cst_70 = arith.constant 1.000000e+00 : f32
    %156 = vector.broadcast %cst_70 : f32 to vector<8x16xf32>
    %157 = arith.addf %156, %155 : vector<8x16xf32>
    %158 = arith.mulf %152, %157 : vector<8x16xf32>
    %c0_71 = arith.constant 0 : index
    %c0_72 = arith.constant 0 : index
    %159 = vector.load %arg16[%c0_71, %c0_72] : memref<3x16xf32, #tpu.memory_space<vmem>>, vector<1x16xf32>
    %160 = vector.broadcast %159 : vector<1x16xf32> to vector<8x16xf32>
    %161 = arith.mulf %158, %160 : vector<8x16xf32>
    %cst_73 = arith.constant dense<0.000000e+00> : vector<8xf32>
    %162 = vector.multi_reduction <add>, %161, %cst_73 [1] : vector<8x16xf32> to vector<8xf32>
    %163 = vector.shape_cast %162 : vector<8xf32> to vector<8x1xf32>
    %c0_74 = arith.constant 0 : index
    %c0_75 = arith.constant 0 : index
    %164 = vector.load %arg17[%c0_74, %c0_75] : memref<1x3xf32, #tpu.memory_space<vmem>>, vector<1x1xf32>
    %165 = vector.broadcast %164 : vector<1x1xf32> to vector<8x1xf32>
    %166 = arith.addf %163, %165 : vector<8x1xf32>
    %167 = arith.addf %61, %166 : vector<8x1xf32>
    %168 = vector.extract_strided_slice %5 {offsets = [0, 96], sizes = [8, 16], strides = [1, 1]} : vector<8x128xf32> to vector<8x16xf32>
    %c1 = arith.constant 1 : index
    %c0_76 = arith.constant 0 : index
    %169 = vector.load %arg14[%c1, %c0_76] : memref<3x16xf32, #tpu.memory_space<vmem>>, vector<1x16xf32>
    %c1_77 = arith.constant 1 : index
    %c0_78 = arith.constant 0 : index
    %170 = vector.load %arg15[%c1_77, %c0_78] : memref<3x16xf32, #tpu.memory_space<vmem>>, vector<1x16xf32>
    %cst_79 = arith.constant dense<0.000000e+00> : vector<8xf32>
    %171 = vector.multi_reduction <add>, %168, %cst_79 [1] : vector<8x16xf32> to vector<8xf32>
    %172 = vector.shape_cast %171 : vector<8xf32> to vector<8x1xf32>
    %cst_80 = arith.constant 1.600000e+01 : f32
    %173 = vector.broadcast %cst_80 : f32 to vector<8x1xf32>
    %174 = arith.divf %172, %173 : vector<8x1xf32>
    %175 = vector.broadcast %174 : vector<8x1xf32> to vector<8x16xf32>
    %176 = arith.subf %168, %175 : vector<8x16xf32>
    %177 = arith.mulf %176, %176 : vector<8x16xf32>
    %cst_81 = arith.constant dense<0.000000e+00> : vector<8xf32>
    %178 = vector.multi_reduction <add>, %177, %cst_81 [1] : vector<8x16xf32> to vector<8xf32>
    %179 = vector.shape_cast %178 : vector<8xf32> to vector<8x1xf32>
    %cst_82 = arith.constant 1.600000e+01 : f32
    %180 = vector.broadcast %cst_82 : f32 to vector<8x1xf32>
    %181 = arith.divf %179, %180 : vector<8x1xf32>
    %182 = vector.broadcast %174 : vector<8x1xf32> to vector<8x16xf32>
    %183 = arith.subf %168, %182 : vector<8x16xf32>
    %cst_83 = arith.constant 9.99999974E-6 : f32
    %184 = vector.broadcast %cst_83 : f32 to vector<8x1xf32>
    %185 = arith.addf %181, %184 : vector<8x1xf32>
    %186 = math.rsqrt %185 : vector<8x1xf32>
    %187 = vector.broadcast %186 : vector<8x1xf32> to vector<8x16xf32>
    %188 = arith.mulf %183, %187 : vector<8x16xf32>
    %189 = vector.broadcast %169 : vector<1x16xf32> to vector<8x16xf32>
    %190 = arith.mulf %188, %189 : vector<8x16xf32>
    %191 = vector.broadcast %170 : vector<1x16xf32> to vector<8x16xf32>
    %192 = arith.addf %190, %191 : vector<8x16xf32>
    %cst_84 = arith.constant 5.000000e-01 : f32
    %193 = vector.broadcast %cst_84 : f32 to vector<8x16xf32>
    %194 = arith.mulf %193, %192 : vector<8x16xf32>
    %cst_85 = arith.constant 1.41421354 : f32
    %195 = vector.broadcast %cst_85 : f32 to vector<8x16xf32>
    %196 = arith.divf %192, %195 : vector<8x16xf32>
    %197 = math.erf %196 : vector<8x16xf32>
    %cst_86 = arith.constant 1.000000e+00 : f32
    %198 = vector.broadcast %cst_86 : f32 to vector<8x16xf32>
    %199 = arith.addf %198, %197 : vector<8x16xf32>
    %200 = arith.mulf %194, %199 : vector<8x16xf32>
    %c1_87 = arith.constant 1 : index
    %c0_88 = arith.constant 0 : index
    %201 = vector.load %arg16[%c1_87, %c0_88] : memref<3x16xf32, #tpu.memory_space<vmem>>, vector<1x16xf32>
    %202 = vector.broadcast %201 : vector<1x16xf32> to vector<8x16xf32>
    %203 = arith.mulf %200, %202 : vector<8x16xf32>
    %cst_89 = arith.constant dense<0.000000e+00> : vector<8xf32>
    %204 = vector.multi_reduction <add>, %203, %cst_89 [1] : vector<8x16xf32> to vector<8xf32>
    %205 = vector.shape_cast %204 : vector<8xf32> to vector<8x1xf32>
    %c0_90 = arith.constant 0 : index
    %c1_91 = arith.constant 1 : index
    %206 = vector.load %arg17[%c0_90, %c1_91] : memref<1x3xf32, #tpu.memory_space<vmem>>, vector<1x1xf32>
    %207 = vector.broadcast %206 : vector<1x1xf32> to vector<8x1xf32>
    %208 = arith.addf %205, %207 : vector<8x1xf32>
    %209 = arith.addf %61, %208 : vector<8x1xf32>
    %210 = vector.extract_strided_slice %5 {offsets = [0, 112], sizes = [8, 16], strides = [1, 1]} : vector<8x128xf32> to vector<8x16xf32>
    %c2 = arith.constant 2 : index
    %c0_92 = arith.constant 0 : index
    %211 = vector.load %arg14[%c2, %c0_92] : memref<3x16xf32, #tpu.memory_space<vmem>>, vector<1x16xf32>
    %c2_93 = arith.constant 2 : index
    %c0_94 = arith.constant 0 : index
    %212 = vector.load %arg15[%c2_93, %c0_94] : memref<3x16xf32, #tpu.memory_space<vmem>>, vector<1x16xf32>
    %cst_95 = arith.constant dense<0.000000e+00> : vector<8xf32>
    %213 = vector.multi_reduction <add>, %210, %cst_95 [1] : vector<8x16xf32> to vector<8xf32>
    %214 = vector.shape_cast %213 : vector<8xf32> to vector<8x1xf32>
    %cst_96 = arith.constant 1.600000e+01 : f32
    %215 = vector.broadcast %cst_96 : f32 to vector<8x1xf32>
    %216 = arith.divf %214, %215 : vector<8x1xf32>
    %217 = vector.broadcast %216 : vector<8x1xf32> to vector<8x16xf32>
    %218 = arith.subf %210, %217 : vector<8x16xf32>
    %219 = arith.mulf %218, %218 : vector<8x16xf32>
    %cst_97 = arith.constant dense<0.000000e+00> : vector<8xf32>
    %220 = vector.multi_reduction <add>, %219, %cst_97 [1] : vector<8x16xf32> to vector<8xf32>
    %221 = vector.shape_cast %220 : vector<8xf32> to vector<8x1xf32>
    %cst_98 = arith.constant 1.600000e+01 : f32
    %222 = vector.broadcast %cst_98 : f32 to vector<8x1xf32>
    %223 = arith.divf %221, %222 : vector<8x1xf32>
    %224 = vector.broadcast %216 : vector<8x1xf32> to vector<8x16xf32>
    %225 = arith.subf %210, %224 : vector<8x16xf32>
    %cst_99 = arith.constant 9.99999974E-6 : f32
    %226 = vector.broadcast %cst_99 : f32 to vector<8x1xf32>
    %227 = arith.addf %223, %226 : vector<8x1xf32>
    %228 = math.rsqrt %227 : vector<8x1xf32>
    %229 = vector.broadcast %228 : vector<8x1xf32> to vector<8x16xf32>
    %230 = arith.mulf %225, %229 : vector<8x16xf32>
    %231 = vector.broadcast %211 : vector<1x16xf32> to vector<8x16xf32>
    %232 = arith.mulf %230, %231 : vector<8x16xf32>
    %233 = vector.broadcast %212 : vector<1x16xf32> to vector<8x16xf32>
    %234 = arith.addf %232, %233 : vector<8x16xf32>
    %cst_100 = arith.constant 5.000000e-01 : f32
    %235 = vector.broadcast %cst_100 : f32 to vector<8x16xf32>
    %236 = arith.mulf %235, %234 : vector<8x16xf32>
    %cst_101 = arith.constant 1.41421354 : f32
    %237 = vector.broadcast %cst_101 : f32 to vector<8x16xf32>
    %238 = arith.divf %234, %237 : vector<8x16xf32>
    %239 = math.erf %238 : vector<8x16xf32>
    %cst_102 = arith.constant 1.000000e+00 : f32
    %240 = vector.broadcast %cst_102 : f32 to vector<8x16xf32>
    %241 = arith.addf %240, %239 : vector<8x16xf32>
    %242 = arith.mulf %236, %241 : vector<8x16xf32>
    %c2_103 = arith.constant 2 : index
    %c0_104 = arith.constant 0 : index
    %243 = vector.load %arg16[%c2_103, %c0_104] : memref<3x16xf32, #tpu.memory_space<vmem>>, vector<1x16xf32>
    %244 = vector.broadcast %243 : vector<1x16xf32> to vector<8x16xf32>
    %245 = arith.mulf %242, %244 : vector<8x16xf32>
    %cst_105 = arith.constant dense<0.000000e+00> : vector<8xf32>
    %246 = vector.multi_reduction <add>, %245, %cst_105 [1] : vector<8x16xf32> to vector<8xf32>
    %247 = vector.shape_cast %246 : vector<8xf32> to vector<8x1xf32>
    %c0_106 = arith.constant 0 : index
    %c2_107 = arith.constant 2 : index
    %248 = vector.load %arg17[%c0_106, %c2_107] : memref<1x3xf32, #tpu.memory_space<vmem>>, vector<1x1xf32>
    %249 = vector.broadcast %248 : vector<1x1xf32> to vector<8x1xf32>
    %250 = arith.addf %247, %249 : vector<8x1xf32>
    %251 = arith.addf %61, %250 : vector<8x1xf32>
    %252 = tpu.concatenate %61, %167, %209, %251 in 1 : vector<8x1xf32>, vector<8x1xf32>, vector<8x1xf32>, vector<8x1xf32> -> vector<8x4xf32>
    %c0_108 = arith.constant 0 : index
    %c0_109 = arith.constant 0 : index
    %253 = vector.load %arg20[%c0_108, %c0_109] : memref<8x4xf32, #tpu.memory_space<vmem>>, vector<8x4xf32>
    tpu.vector_store %arg20[%c0_108, %c0_109], %252 {strides = array<i32>} : memref<8x4xf32, #tpu.memory_space<vmem>>, vector<8x4xf32>,
    %254 = vector.shape_cast %125 : vector<8x1xf32> to vector<8x1xf32>
    %255 = vector.broadcast %254 : vector<8x1xf32> to vector<8x4xf32>
    %c0_110 = arith.constant 0 : index
    %c0_111 = arith.constant 0 : index
    %256 = vector.load %arg21[%c0_110, %c0_111] : memref<8x4xf32, #tpu.memory_space<vmem>>, vector<8x4xf32>
    tpu.vector_store %arg21[%c0_110, %c0_111], %255 {strides = array<i32>} : memref<8x4xf32, #tpu.memory_space<vmem>>, vector<8x4xf32>,
    return
  }
  func.func @transform_0(%arg0: i32) -> (i32, i32) {
    %c0_i32 = arith.constant 0 : i32
    %c0_i32_0 = arith.constant 0 : i32
    return %arg0, %c0_i32 : i32, i32
  }
  func.func @transform_1(%arg0: i32) -> (i32, i32) {
    %c0_i32 = arith.constant 0 : i32
    %c0_i32_0 = arith.constant 0 : i32
    %c0_i32_1 = arith.constant 0 : i32
    return %c0_i32, %c0_i32_0 : i32, i32
  }
  func.func @transform_2(%arg0: i32) -> (i32, i32) {
    %c0_i32 = arith.constant 0 : i32
    %c0_i32_0 = arith.constant 0 : i32
    %c0_i32_1 = arith.constant 0 : i32
    return %c0_i32, %c0_i32_0 : i32, i32
  }
  func.func @transform_3(%arg0: i32) -> (i32, i32) {
    %c0_i32 = arith.constant 0 : i32
    %c0_i32_0 = arith.constant 0 : i32
    %c0_i32_1 = arith.constant 0 : i32
    return %c0_i32, %c0_i32_0 : i32, i32
  }
  func.func @transform_4(%arg0: i32) -> (i32, i32) {
    %c0_i32 = arith.constant 0 : i32
    %c0_i32_0 = arith.constant 0 : i32
    %c0_i32_1 = arith.constant 0 : i32
    return %c0_i32, %c0_i32_0 : i32, i32
  }
  func.func @transform_5(%arg0: i32) -> (i32, i32) {
    %c0_i32 = arith.constant 0 : i32
    %c0_i32_0 = arith.constant 0 : i32
    %c0_i32_1 = arith.constant 0 : i32
    return %c0_i32, %c0_i32_0 : i32, i32
  }
  func.func @transform_6(%arg0: i32) -> (i32, i32) {
    %c0_i32 = arith.constant 0 : i32
    %c0_i32_0 = arith.constant 0 : i32
    %c0_i32_1 = arith.constant 0 : i32
    return %c0_i32, %c0_i32_0 : i32, i32
  }
  func.func @transform_7(%arg0: i32) -> (i32, i32) {
    %c0_i32 = arith.constant 0 : i32
    %c0_i32_0 = arith.constant 0 : i32
    %c0_i32_1 = arith.constant 0 : i32
    return %c0_i32, %c0_i32_0 : i32, i32
  }
  func.func @transform_8(%arg0: i32) -> (i32, i32) {
    %c0_i32 = arith.constant 0 : i32
    %c0_i32_0 = arith.constant 0 : i32
    %c0_i32_1 = arith.constant 0 : i32
    return %c0_i32, %c0_i32_0 : i32, i32
  }
  func.func @transform_9(%arg0: i32) -> (i32, i32) {
    %c0_i32 = arith.constant 0 : i32
    %c0_i32_0 = arith.constant 0 : i32
    %c0_i32_1 = arith.constant 0 : i32
    return %c0_i32, %c0_i32_0 : i32, i32
  }
  func.func @transform_10(%arg0: i32) -> (i32, i32) {
    %c0_i32 = arith.constant 0 : i32
    %c0_i32_0 = arith.constant 0 : i32
    %c0_i32_1 = arith.constant 0 : i32
    return %c0_i32, %c0_i32_0 : i32, i32
  }
  func.func @transform_11(%arg0: i32) -> (i32, i32) {
    %c0_i32 = arith.constant 0 : i32
    %c0_i32_0 = arith.constant 0 : i32
    %c0_i32_1 = arith.constant 0 : i32
    return %c0_i32, %c0_i32_0 : i32, i32
  }
  func.func @transform_12(%arg0: i32) -> (i32, i32) {
    %c0_i32 = arith.constant 0 : i32
    %c0_i32_0 = arith.constant 0 : i32
    %c0_i32_1 = arith.constant 0 : i32
    return %c0_i32, %c0_i32_0 : i32, i32
  }
  func.func @transform_13(%arg0: i32) -> (i32, i32) {
    %c0_i32 = arith.constant 0 : i32
    %c0_i32_0 = arith.constant 0 : i32
    %c0_i32_1 = arith.constant 0 : i32
    return %c0_i32, %c0_i32_0 : i32, i32
  }
  func.func @transform_14(%arg0: i32) -> (i32, i32) {
    %c0_i32 = arith.constant 0 : i32
    %c0_i32_0 = arith.constant 0 : i32
    %c0_i32_1 = arith.constant 0 : i32
    return %c0_i32, %c0_i32_0 : i32, i32
  }
  func.func @transform_15(%arg0: i32) -> (i32, i32) {
    %c0_i32 = arith.constant 0 : i32
    %c0_i32_0 = arith.constant 0 : i32
    %c0_i32_1 = arith.constant 0 : i32
    return %c0_i32, %c0_i32_0 : i32, i32
  }
  func.func @transform_16(%arg0: i32) -> (i32, i32) {
    %c0_i32 = arith.constant 0 : i32
    %c0_i32_0 = arith.constant 0 : i32
    %c0_i32_1 = arith.constant 0 : i32
    return %c0_i32, %c0_i32_0 : i32, i32
  }
  func.func @transform_17(%arg0: i32) -> (i32, i32) {
    %c0_i32 = arith.constant 0 : i32
    %c0_i32_0 = arith.constant 0 : i32
    %c0_i32_1 = arith.constant 0 : i32
    return %c0_i32, %c0_i32_0 : i32, i32
  }
  func.func @transform_18(%arg0: i32) -> (i32, i32) {
    %c0_i32 = arith.constant 0 : i32
    %c0_i32_0 = arith.constant 0 : i32
    %c0_i32_1 = arith.constant 0 : i32
    return %c0_i32, %c0_i32_0 : i32, i32
  }
  func.func @transform_19(%arg0: i32) -> (i32, i32) {
    %c0_i32 = arith.constant 0 : i32
    %c0_i32_0 = arith.constant 0 : i32
    return %arg0, %c0_i32 : i32, i32
  }
  func.func @transform_20(%arg0: i32) -> (i32, i32) {
    %c0_i32 = arith.constant 0 : i32
    %c0_i32_0 = arith.constant 0 : i32
    return %arg0, %c0_i32 : i32, i32
  }
  func.func @transform_21(%arg0: i32) -> (i32, i32) {
    %c0_i32 = arith.constant 0 : i32
    %c0_i32_0 = arith.constant 0 : i32
    return %arg0, %c0_i32 : i32, i32
  }
}

</mosaic_0001>

<llo_original>
// kernel: tpu_custom_call.1
$region0: #{tpu_custom_call.1}
  #allocation0 [shape = 'u32[]', space=smem, size = 0x4, offset = 0x4, fixed_abs, tag = 'smem constant byte address 0x4 - core index']
  #allocation1 [shape = 'u32[144,128]{1,0:T(1,128)}', space=vmem, size = 0x12000, scoped, tag = 'internal scratch']
  #allocation2 [shape = 'f32[1,1]{1,0:T(1,128)S(1)}', space=vmem, size = 0x200, scoped, tag = 'scoped memory for tpu_custom_call.1']
  #allocation3 [shape = 'f32[1,1]{1,0:T(1,128)S(1)}', space=vmem, size = 0x200, scoped, tag = 'scoped memory for tpu_custom_call.1']
  %s0 = inlined_call_operand.vmem [shape: f32[16,32], index: 0, kind: input, shape index: {}]
  %s1 = inlined_call_operand.vmem [shape: f32[32,128], index: 1, kind: input, shape index: {}]
  %s2 = inlined_call_operand.vmem [shape: f32[1,128], index: 2, kind: input, shape index: {}]
  %s3 = inlined_call_operand.vmem [shape: f32[1,32], index: 3, kind: input, shape index: {}]
  %s4 = inlined_call_operand.vmem [shape: f32[1,32], index: 4, kind: input, shape index: {}]
  %s5 = inlined_call_operand.vmem [shape: f32[32,16], index: 5, kind: input, shape index: {}]
  %s6 = inlined_call_operand.vmem [shape: f32[1,16], index: 6, kind: input, shape index: {}]
  %s7 = inlined_call_operand.vmem [shape: f32[1,16], index: 7, kind: input, shape index: {}]
  %s8 = inlined_call_operand.<no memory space> [shape: f32[1,1], index: 8, kind: input, shape index: {}]
  %s9 = inlined_call_operand.vmem [shape: f32[1,32], index: 9, kind: input, shape index: {}]
  %s10 = inlined_call_operand.vmem [shape: f32[1,32], index: 10, kind: input, shape index: {}]
  %s11 = inlined_call_operand.vmem [shape: f32[32,4], index: 11, kind: input, shape index: {}]
  %s12 = inlined_call_operand.vmem [shape: f32[1,4], index: 12, kind: input, shape index: {}]
  %s13 = inlined_call_operand.vmem [shape: f32[3,16], index: 13, kind: input, shape index: {}]
  %s14 = inlined_call_operand.vmem [shape: f32[3,16], index: 14, kind: input, shape index: {}]
  %s15 = inlined_call_operand.vmem [shape: f32[3,16], index: 15, kind: input, shape index: {}]
  %s16 = inlined_call_operand.vmem [shape: f32[1,3], index: 16, kind: input, shape index: {}]
  %s17 = inlined_call_operand.vmem [shape: f32[1,16], index: 17, kind: input, shape index: {}]
  %s18 = inlined_call_operand.<no memory space> [shape: f32[1,1], index: 18, kind: input, shape index: {}]
  %s19 = inlined_call_operand.vmem [shape: f32[16,4], index: 19, kind: output, shape index: {0}]
  %s20 = inlined_call_operand.vmem [shape: f32[16,4], index: 20, kind: output, shape index: {1}]
  %s21 = inlined_call_operand.vmem [shape: f32[16,4], index: 21, kind: output, shape index: {2}]
  %22 = xla_tuple %s19, %s20, %s21
  %s23 = sld [smem:[#allocation0]]
  $region125: #{tpu_custom_call.1} parent=0
    _
  %s25 = ssub.s32 1, %s23
  %s26 = scalar_select 0, %s25, %s23
  %v27 = vstv %s8
  %28 = vst [vmem:[#allocation2] sm:$0x1] %v27
  %v29 = vstv %s18
  %30 = vst [vmem:[#allocation3] sm:$0x1] %v29
  loop: start=0, step=1, limit=4
  $region2: #{tpu_custom_call.1} parent=0 // loop_pre_header
    _
  $region3: #{tpu_custom_call.1} parent=0 // loop_header
    %s32 = sphi 0, %s36
    %p33 = scmp.ge.s32.totalorder %s32, 4
    %s42 = sphi 0, %s44
    %s45 = sphi 0, %s42
    %s46 = sphi 0, %s45
    %s62 = sphi 0, %s46
    %s66 = sphi 0, %s66
    %s68 = sphi 0, %s66
    %s69 = sphi 0, %s68
    %s83 = sphi 0, %s69
    %s87 = sphi 0, %s87
    %s89 = sphi 0, %s87
    %s90 = sphi 0, %s89
    %s104 = sphi 0, %s90
    %s108 = sphi 0, %s108
    %s110 = sphi 0, %s108
    %s111 = sphi 0, %s110
    %s125 = sphi 0, %s111
    %s129 = sphi 0, %s129
    %s131 = sphi 0, %s129
    %s132 = sphi 0, %s131
    %s146 = sphi 0, %s132
    %s150 = sphi 0, %s150
    %s152 = sphi 0, %s150
    %s153 = sphi 0, %s152
    %s167 = sphi 0, %s153
    %s171 = sphi 0, %s171
    %s173 = sphi 0, %s171
    %s174 = sphi 0, %s173
    %s188 = sphi 0, %s174
    %s192 = sphi 0, %s192
    %s194 = sphi 0, %s192
    %s195 = sphi 0, %s194
    %s209 = sphi 0, %s195
    %s213 = sphi 0, %s213
    %s215 = sphi 0, %s213
    %s216 = sphi 0, %s215
    %s230 = sphi 0, %s216
    %s234 = sphi 0, %s234
    %s236 = sphi 0, %s234
    %s237 = sphi 0, %s236
    %s251 = sphi 0, %s237
    %s255 = sphi 0, %s255
    %s257 = sphi 0, %s255
    %s258 = sphi 0, %s257
    %s272 = sphi 0, %s258
    %s276 = sphi 0, %s276
    %s278 = sphi 0, %s276
    %s279 = sphi 0, %s278
    %s293 = sphi 0, %s279
    %s297 = sphi 0, %s297
    %s299 = sphi 0, %s297
    %s300 = sphi 0, %s299
    %s314 = sphi 0, %s300
    %s318 = sphi 0, %s318
    %s320 = sphi 0, %s318
    %s321 = sphi 0, %s320
    %s335 = sphi 0, %s321
    %s339 = sphi 0, %s339
    %s341 = sphi 0, %s339
    %s342 = sphi 0, %s341
    %s356 = sphi 0, %s342
    %s360 = sphi 0, %s360
    %s362 = sphi 0, %s360
    %s363 = sphi 0, %s362
    %s377 = sphi 0, %s363
    %s381 = sphi 0, %s381
    %s383 = sphi 0, %s381
    %s384 = sphi 0, %s383
    %s398 = sphi 0, %s384
    %s402 = sphi 0, %s402
    %s404 = sphi 0, %s402
    %s405 = sphi 0, %s404
    %s419 = sphi 0, %s405
    %s423 = sphi 0, %s423
    %s425 = sphi 0, %s423
    %s426 = sphi 0, %s425
    %s440 = sphi 0, %s426
    %s446 = sphi 0, %s448
    %s449 = sphi 0, %s446
    %s450 = sphi 0, %s449
    %s466 = sphi 0, %s450
    %s472 = sphi 0, %s474
    %s475 = sphi 0, %s472
    %s476 = sphi 0, %s475
    %s492 = sphi 0, %s476
    %s498 = sphi 0, %s500
    %s501 = sphi 0, %s498
    %s502 = sphi 0, %s501
    %s518 = sphi 0, %s502
  $region4: #{tpu_custom_call.1} parent=0 // loop_header_branch
    %35 = sbr.rel (%p33) target = $region8
  $region5: #{tpu_custom_call.1} parent=0 // loop_body
    %s37 = ssub.s32 %s32, 1
    %s38 = ssub.s32 %s32, 2
    %s39 = sadd.s32 %s32, 1
    %s40 = ssub.s32 %s32, %s39
    %p41 = scmp.eq.s32.totalorder %s40, 0
    %s43 = sadd.s32 %s42, 1
    %s44 = scalar_select %p41, %s42, %s43
    %p47 = pneg %p41
    %p48 = scmp.eq.s32.totalorder %s32, 1
    %p49 = por %p47, %p48
    %p50 = scmp.ne.s32.totalorder %s42, %s45
    %p51 = scmp.eq.s32.totalorder %s32, 0
    %p52 = por %p50, %p51
    %p53 = scmp.ne.s32.totalorder %s42, %s45
    %p54 = scmp.eq.s32.totalorder %s37, 1
    %p55 = por %p53, %p54
    %p56 = scmp.ne.s32.totalorder %s45, %s46
    %p57 = scmp.eq.s32.totalorder %s37, 0
    %p58 = por %p56, %p57
    %p59 = scmp.ne.s32.totalorder %s45, %s46
    %p60 = scmp.eq.s32.totalorder %s38, 1
    %p61 = por %p59, %p60
    %p63 = scmp.ne.s32.totalorder %s46, %s62
    %p64 = scmp.eq.s32.totalorder %s38, 0
    %p65 = por %p63, %p64
    %s67 = sadd.s32 %s66, 1
    %p70 = scmp.eq.s32.totalorder %s32, 1
    %p71 = scmp.ne.s32.totalorder %s66, %s68
    %p72 = scmp.eq.s32.totalorder %s32, 0
    %p73 = por %p71, %p72
    %p74 = scmp.ne.s32.totalorder %s66, %s68
    %p75 = scmp.eq.s32.totalorder %s37, 1
    %p76 = por %p74, %p75
    %p77 = scmp.ne.s32.totalorder %s68, %s69
    %p78 = scmp.eq.s32.totalorder %s37, 0
    %p79 = por %p77, %p78
    %p80 = scmp.ne.s32.totalorder %s68, %s69
    %p81 = scmp.eq.s32.totalorder %s38, 1
    %p82 = por %p80, %p81
    %p84 = scmp.ne.s32.totalorder %s69, %s83
    %p85 = scmp.eq.s32.totalorder %s38, 0
    %p86 = por %p84, %p85
    %s88 = sadd.s32 %s87, 1
    %p91 = scmp.eq.s32.totalorder %s32, 1
    %p92 = scmp.ne.s32.totalorder %s87, %s89
    %p93 = scmp.eq.s32.totalorder %s32, 0
    %p94 = por %p92, %p93
    %p95 = scmp.ne.s32.totalorder %s87, %s89
    %p96 = scmp.eq.s32.totalorder %s37, 1
    %p97 = por %p95, %p96
    %p98 = scmp.ne.s32.totalorder %s89, %s90
    %p99 = scmp.eq.s32.totalorder %s37, 0
    %p100 = por %p98, %p99
    %p101 = scmp.ne.s32.totalorder %s89, %s90
    %p102 = scmp.eq.s32.totalorder %s38, 1
    %p103 = por %p101, %p102
    %p105 = scmp.ne.s32.totalorder %s90, %s104
    %p106 = scmp.eq.s32.totalorder %s38, 0
    %p107 = por %p105, %p106
    %s109 = sadd.s32 %s108, 1
    %p112 = scmp.eq.s32.totalorder %s32, 1
    %p113 = scmp.ne.s32.totalorder %s108, %s110
    %p114 = scmp.eq.s32.totalorder %s32, 0
    %p115 = por %p113, %p114
    %p116 = scmp.ne.s32.totalorder %s108, %s110
    %p117 = scmp.eq.s32.totalorder %s37, 1
    %p118 = por %p116, %p117
    %p119 = scmp.ne.s32.totalorder %s110, %s111
    %p120 = scmp.eq.s32.totalorder %s37, 0
    %p121 = por %p119, %p120
    %p122 = scmp.ne.s32.totalorder %s110, %s111
    %p123 = scmp.eq.s32.totalorder %s38, 1
    %p124 = por %p122, %p123
    %p126 = scmp.ne.s32.totalorder %s111, %s125
    %p127 = scmp.eq.s32.totalorder %s38, 0
    %p128 = por %p126, %p127
    %s130 = sadd.s32 %s129, 1
    %p133 = scmp.eq.s32.totalorder %s32, 1
    %p134 = scmp.ne.s32.totalorder %s129, %s131
    %p135 = scmp.eq.s32.totalorder %s32, 0
    %p136 = por %p134, %p135
    %p137 = scmp.ne.s32.totalorder %s129, %s131
    %p138 = scmp.eq.s32.totalorder %s37, 1
    %p139 = por %p137, %p138
    %p140 = scmp.ne.s32.totalorder %s131, %s132
    %p141 = scmp.eq.s32.totalorder %s37, 0
    %p142 = por %p140, %p141
    %p143 = scmp.ne.s32.totalorder %s131, %s132
    %p144 = scmp.eq.s32.totalorder %s38, 1
    %p145 = por %p143, %p144
    %p147 = scmp.ne.s32.totalorder %s132, %s146
    %p148 = scmp.eq.s32.totalorder %s38, 0
    %p149 = por %p147, %p148
    %s151 = sadd.s32 %s150, 1
    %p154 = scmp.eq.s32.totalorder %s32, 1
    %p155 = scmp.ne.s32.totalorder %s150, %s152
    %p156 = scmp.eq.s32.totalorder %s32, 0
    %p157 = por %p155, %p156
    %p158 = scmp.ne.s32.totalorder %s150, %s152
    %p159 = scmp.eq.s32.totalorder %s37, 1
    %p160 = por %p158, %p159
    %p161 = scmp.ne.s32.totalorder %s152, %s153
    %p162 = scmp.eq.s32.totalorder %s37, 0
    %p163 = por %p161, %p162
    %p164 = scmp.ne.s32.totalorder %s152, %s153
    %p165 = scmp.eq.s32.totalorder %s38, 1
    %p166 = por %p164, %p165
    %p168 = scmp.ne.s32.totalorder %s153, %s167
    %p169 = scmp.eq.s32.totalorder %s38, 0
    %p170 = por %p168, %p169
    %s172 = sadd.s32 %s171, 1
    %p175 = scmp.eq.s32.totalorder %s32, 1
    %p176 = scmp.ne.s32.totalorder %s171, %s173
    %p177 = scmp.eq.s32.totalorder %s32, 0
    %p178 = por %p176, %p177
    %p179 = scmp.ne.s32.totalorder %s171, %s173
    %p180 = scmp.eq.s32.totalorder %s37, 1
    %p181 = por %p179, %p180
    %p182 = scmp.ne.s32.totalorder %s173, %s174
    %p183 = scmp.eq.s32.totalorder %s37, 0
    %p184 = por %p182, %p183
    %p185 = scmp.ne.s32.totalorder %s173, %s174
    %p186 = scmp.eq.s32.totalorder %s38, 1
    %p187 = por %p185, %p186
    %p189 = scmp.ne.s32.totalorder %s174, %s188
    %p190 = scmp.eq.s32.totalorder %s38, 0
    %p191 = por %p189, %p190
    %s193 = sadd.s32 %s192, 1
    %p196 = scmp.eq.s32.totalorder %s32, 1
    %p197 = scmp.ne.s32.totalorder %s192, %s194
    %p198 = scmp.eq.s32.totalorder %s32, 0
    %p199 = por %p197, %p198
    %p200 = scmp.ne.s32.totalorder %s192, %s194
    %p201 = scmp.eq.s32.totalorder %s37, 1
    %p202 = por %p200, %p201
    %p203 = scmp.ne.s32.totalorder %s194, %s195
    %p204 = scmp.eq.s32.totalorder %s37, 0
    %p205 = por %p203, %p204
    %p206 = scmp.ne.s32.totalorder %s194, %s195
    %p207 = scmp.eq.s32.totalorder %s38, 1
    %p208 = por %p206, %p207
    %p210 = scmp.ne.s32.totalorder %s195, %s209
    %p211 = scmp.eq.s32.totalorder %s38, 0
    %p212 = por %p210, %p211
    %s214 = sadd.s32 %s213, 1
    %p217 = scmp.eq.s32.totalorder %s32, 1
    %p218 = scmp.ne.s32.totalorder %s213, %s215
    %p219 = scmp.eq.s32.totalorder %s32, 0
    %p220 = por %p218, %p219
    %p221 = scmp.ne.s32.totalorder %s213, %s215
    %p222 = scmp.eq.s32.totalorder %s37, 1
    %p223 = por %p221, %p222
    %p224 = scmp.ne.s32.totalorder %s215, %s216
    %p225 = scmp.eq.s32.totalorder %s37, 0
    %p226 = por %p224, %p225
    %p227 = scmp.ne.s32.totalorder %s215, %s216
    %p228 = scmp.eq.s32.totalorder %s38, 1
    %p229 = por %p227, %p228
    %p231 = scmp.ne.s32.totalorder %s216, %s230
    %p232 = scmp.eq.s32.totalorder %s38, 0
    %p233 = por %p231, %p232
    %s235 = sadd.s32 %s234, 1
    %p238 = scmp.eq.s32.totalorder %s32, 1
    %p239 = scmp.ne.s32.totalorder %s234, %s236
    %p240 = scmp.eq.s32.totalorder %s32, 0
    %p241 = por %p239, %p240
    %p242 = scmp.ne.s32.totalorder %s234, %s236
    %p243 = scmp.eq.s32.totalorder %s37, 1
    %p244 = por %p242, %p243
    %p245 = scmp.ne.s32.totalorder %s236, %s237
    %p246 = scmp.eq.s32.totalorder %s37, 0
    %p247 = por %p245, %p246
    %p248 = scmp.ne.s32.totalorder %s236, %s237
    %p249 = scmp.eq.s32.totalorder %s38, 1
    %p250 = por %p248, %p249
    %p252 = scmp.ne.s32.totalorder %s237, %s251
    %p253 = scmp.eq.s32.totalorder %s38, 0
    %p254 = por %p252, %p253
    %s256 = sadd.s32 %s255, 1
    %p259 = scmp.eq.s32.totalorder %s32, 1
    %p260 = scmp.ne.s32.totalorder %s255, %s257
    %p261 = scmp.eq.s32.totalorder %s32, 0
    %p262 = por %p260, %p261
    %p263 = scmp.ne.s32.totalorder %s255, %s257
    %p264 = scmp.eq.s32.totalorder %s37, 1
    %p265 = por %p263, %p264
    %p266 = scmp.ne.s32.totalorder %s257, %s258
    %p267 = scmp.eq.s32.totalorder %s37, 0
    %p268 = por %p266, %p267
    %p269 = scmp.ne.s32.totalorder %s257, %s258
    %p270 = scmp.eq.s32.totalorder %s38, 1
    %p271 = por %p269, %p270
    %p273 = scmp.ne.s32.totalorder %s258, %s272
    %p274 = scmp.eq.s32.totalorder %s38, 0
    %p275 = por %p273, %p274
    %s277 = sadd.s32 %s276, 1
    %p280 = scmp.eq.s32.totalorder %s32, 1
    %p281 = scmp.ne.s32.totalorder %s276, %s278
    %p282 = scmp.eq.s32.totalorder %s32, 0
    %p283 = por %p281, %p282
    %p284 = scmp.ne.s32.totalorder %s276, %s278
    %p285 = scmp.eq.s32.totalorder %s37, 1
    %p286 = por %p284, %p285
    %p287 = scmp.ne.s32.totalorder %s278, %s279
    %p288 = scmp.eq.s32.totalorder %s37, 0
    %p289 = por %p287, %p288
    %p290 = scmp.ne.s32.totalorder %s278, %s279
    %p291 = scmp.eq.s32.totalorder %s38, 1
    %p292 = por %p290, %p291
    %p294 = scmp.ne.s32.totalorder %s279, %s293
    %p295 = scmp.eq.s32.totalorder %s38, 0
    %p296 = por %p294, %p295
    %s298 = sadd.s32 %s297, 1
    %p301 = scmp.eq.s32.totalorder %s32, 1
    %p302 = scmp.ne.s32.totalorder %s297, %s299
    %p303 = scmp.eq.s32.totalorder %s32, 0
    %p304 = por %p302, %p303
    %p305 = scmp.ne.s32.totalorder %s297, %s299
    %p306 = scmp.eq.s32.totalorder %s37, 1
    %p307 = por %p305, %p306
    %p308 = scmp.ne.s32.totalorder %s299, %s300
    %p309 = scmp.eq.s32.totalorder %s37, 0
    %p310 = por %p308, %p309
    %p311 = scmp.ne.s32.totalorder %s299, %s300
    %p312 = scmp.eq.s32.totalorder %s38, 1
    %p313 = por %p311, %p312
    %p315 = scmp.ne.s32.totalorder %s300, %s314
    %p316 = scmp.eq.s32.totalorder %s38, 0
    %p317 = por %p315, %p316
    %s319 = sadd.s32 %s318, 1
    %p322 = scmp.eq.s32.totalorder %s32, 1
    %p323 = scmp.ne.s32.totalorder %s318, %s320
    %p324 = scmp.eq.s32.totalorder %s32, 0
    %p325 = por %p323, %p324
    %p326 = scmp.ne.s32.totalorder %s318, %s320
    %p327 = scmp.eq.s32.totalorder %s37, 1
    %p328 = por %p326, %p327
    %p329 = scmp.ne.s32.totalorder %s320, %s321
    %p330 = scmp.eq.s32.totalorder %s37, 0
    %p331 = por %p329, %p330
    %p332 = scmp.ne.s32.totalorder %s320, %s321
    %p333 = scmp.eq.s32.totalorder %s38, 1
    %p334 = por %p332, %p333
    %p336 = scmp.ne.s32.totalorder %s321, %s335
    %p337 = scmp.eq.s32.totalorder %s38, 0
    %p338 = por %p336, %p337
    %s340 = sadd.s32 %s339, 1
    %p343 = scmp.eq.s32.totalorder %s32, 1
    %p344 = scmp.ne.s32.totalorder %s339, %s341
    %p345 = scmp.eq.s32.totalorder %s32, 0
    %p346 = por %p344, %p345
    %p347 = scmp.ne.s32.totalorder %s339, %s341
    %p348 = scmp.eq.s32.totalorder %s37, 1
    %p349 = por %p347, %p348
    %p350 = scmp.ne.s32.totalorder %s341, %s342
    %p351 = scmp.eq.s32.totalorder %s37, 0
    %p352 = por %p350, %p351
    %p353 = scmp.ne.s32.totalorder %s341, %s342
    %p354 = scmp.eq.s32.totalorder %s38, 1
    %p355 = por %p353, %p354
    %p357 = scmp.ne.s32.totalorder %s342, %s356
    %p358 = scmp.eq.s32.totalorder %s38, 0
    %p359 = por %p357, %p358
    %s361 = sadd.s32 %s360, 1
    %p364 = scmp.eq.s32.totalorder %s32, 1
    %p365 = scmp.ne.s32.totalorder %s360, %s362
    %p366 = scmp.eq.s32.totalorder %s32, 0
    %p367 = por %p365, %p366
    %p368 = scmp.ne.s32.totalorder %s360, %s362
    %p369 = scmp.eq.s32.totalorder %s37, 1
    %p370 = por %p368, %p369
    %p371 = scmp.ne.s32.totalorder %s362, %s363
    %p372 = scmp.eq.s32.totalorder %s37, 0
    %p373 = por %p371, %p372
    %p374 = scmp.ne.s32.totalorder %s362, %s363
    %p375 = scmp.eq.s32.totalorder %s38, 1
    %p376 = por %p374, %p375
    %p378 = scmp.ne.s32.totalorder %s363, %s377
    %p379 = scmp.eq.s32.totalorder %s38, 0
    %p380 = por %p378, %p379
    %s382 = sadd.s32 %s381, 1
    %p385 = scmp.eq.s32.totalorder %s32, 1
    %p386 = scmp.ne.s32.totalorder %s381, %s383
    %p387 = scmp.eq.s32.totalorder %s32, 0
    %p388 = por %p386, %p387
    %p389 = scmp.ne.s32.totalorder %s381, %s383
    %p390 = scmp.eq.s32.totalorder %s37, 1
    %p391 = por %p389, %p390
    %p392 = scmp.ne.s32.totalorder %s383, %s384
    %p393 = scmp.eq.s32.totalorder %s37, 0
    %p394 = por %p392, %p393
    %p395 = scmp.ne.s32.totalorder %s383, %s384
    %p396 = scmp.eq.s32.totalorder %s38, 1
    %p397 = por %p395, %p396
    %p399 = scmp.ne.s32.totalorder %s384, %s398
    %p400 = scmp.eq.s32.totalorder %s38, 0
    %p401 = por %p399, %p400
    %s403 = sadd.s32 %s402, 1
    %p406 = scmp.eq.s32.totalorder %s32, 1
    %p407 = scmp.ne.s32.totalorder %s402, %s404
    %p408 = scmp.eq.s32.totalorder %s32, 0
    %p409 = por %p407, %p408
    %p410 = scmp.ne.s32.totalorder %s402, %s404
    %p411 = scmp.eq.s32.totalorder %s37, 1
    %p412 = por %p410, %p411
    %p413 = scmp.ne.s32.totalorder %s404, %s405
    %p414 = scmp.eq.s32.totalorder %s37, 0
    %p415 = por %p413, %p414
    %p416 = scmp.ne.s32.totalorder %s404, %s405
    %p417 = scmp.eq.s32.totalorder %s38, 1
    %p418 = por %p416, %p417
    %p420 = scmp.ne.s32.totalorder %s405, %s419
    %p421 = scmp.eq.s32.totalorder %s38, 0
    %p422 = por %p420, %p421
    %s424 = sadd.s32 %s423, 1
    %p427 = scmp.eq.s32.totalorder %s32, 1
    %p428 = scmp.ne.s32.totalorder %s423, %s425
    %p429 = scmp.eq.s32.totalorder %s32, 0
    %p430 = por %p428, %p429
    %p431 = scmp.ne.s32.totalorder %s423, %s425
    %p432 = scmp.eq.s32.totalorder %s37, 1
    %p433 = por %p431, %p432
    %p434 = scmp.ne.s32.totalorder %s425, %s426
    %p435 = scmp.eq.s32.totalorder %s37, 0
    %p436 = por %p434, %p435
    %p437 = scmp.ne.s32.totalorder %s425, %s426
    %p438 = scmp.eq.s32.totalorder %s38, 1
    %p439 = por %p437, %p438
    %p441 = scmp.ne.s32.totalorder %s426, %s440
    %p442 = scmp.eq.s32.totalorder %s38, 0
    %p443 = por %p441, %p442
    %s444 = ssub.s32 %s32, %s39
    %p445 = scmp.eq.s32.totalorder %s444, 0
    %s447 = sadd.s32 %s446, 1
    %s448 = scalar_select %p445, %s446, %s447
    %p451 = pneg %p445
    %p452 = scmp.eq.s32.totalorder %s32, 1
    %p453 = por %p451, %p452
    %p454 = scmp.ne.s32.totalorder %s446, %s449
    %p455 = scmp.eq.s32.totalorder %s32, 0
    %p456 = por %p454, %p455
    %p457 = scmp.ne.s32.totalorder %s446, %s449
    %p458 = scmp.eq.s32.totalorder %s37, 1
    %p459 = por %p457, %p458
    %p460 = scmp.ne.s32.totalorder %s449, %s450
    %p461 = scmp.eq.s32.totalorder %s37, 0
    %p462 = por %p460, %p461
    %p463 = scmp.ne.s32.totalorder %s449, %s450
    %p464 = scmp.eq.s32.totalorder %s38, 1
    %p465 = por %p463, %p464
    %p467 = scmp.ne.s32.totalorder %s450, %s466
    %p468 = scmp.eq.s32.totalorder %s38, 0
    %p469 = por %p467, %p468
    %s470 = ssub.s32 %s32, %s39
    %p471 = scmp.eq.s32.totalorder %s470, 0
    %s473 = sadd.s32 %s472, 1
    %s474 = scalar_select %p471, %s472, %s473
    %p477 = pneg %p471
    %p478 = scmp.eq.s32.totalorder %s32, 1
    %p479 = por %p477, %p478
    %p480 = scmp.ne.s32.totalorder %s472, %s475
    %p481 = scmp.eq.s32.totalorder %s32, 0
    %p482 = por %p480, %p481
    %p483 = scmp.ne.s32.totalorder %s472, %s475
    %p484 = scmp.eq.s32.totalorder %s37, 1
    %p485 = por %p483, %p484
    %p486 = scmp.ne.s32.totalorder %s475, %s476
    %p487 = scmp.eq.s32.totalorder %s37, 0
    %p488 = por %p486, %p487
    %p489 = scmp.ne.s32.totalorder %s475, %s476
    %p490 = scmp.eq.s32.totalorder %s38, 1
    %p491 = por %p489, %p490
    %p493 = scmp.ne.s32.totalorder %s476, %s492
    %p494 = scmp.eq.s32.totalorder %s38, 0
    %p495 = por %p493, %p494
    %s496 = ssub.s32 %s32, %s39
    %p497 = scmp.eq.s32.totalorder %s496, 0
    %s499 = sadd.s32 %s498, 1
    %s500 = scalar_select %p497, %s498, %s499
    %p503 = pneg %p497
    %p504 = scmp.eq.s32.totalorder %s32, 1
    %p505 = por %p503, %p504
    %p506 = scmp.ne.s32.totalorder %s498, %s501
    %p507 = scmp.eq.s32.totalorder %s32, 0
    %p508 = por %p506, %p507
    %p509 = scmp.ne.s32.totalorder %s498, %s501
    %p510 = scmp.eq.s32.totalorder %s37, 1
    %p511 = por %p509, %p510
    %p512 = scmp.ne.s32.totalorder %s501, %s502
    %p513 = scmp.eq.s32.totalorder %s37, 0
    %p514 = por %p512, %p513
    %p515 = scmp.ne.s32.totalorder %s501, %s502
    %p516 = scmp.eq.s32.totalorder %s38, 1
    %p517 = por %p515, %p516
    %p519 = scmp.ne.s32.totalorder %s502, %s518
    %p520 = scmp.eq.s32.totalorder %s38, 0
    %p521 = por %p519, %p520
    %p522 = scmp.le.s32.totalorder 1, %s32
    %p523 = scmp.lt.s32.totalorder %s32, 3
    %p524 = pnand %p522, %p523
    %p525 = pneg %p524
    // Predicated region
    $region9: #{tpu_custom_call.1} parent=5 // pred_check
      _
    $region10: #{tpu_custom_call.1} parent=5 // pred_check_branch
      %527 = sbr.rel (%p524) target = $region12
    $region11: #{tpu_custom_call.1} parent=5 // pred_region
      %s528 = ssub.s32 %s32, 1
      // Predicated region
      $region13: #{tpu_custom_call.1} parent=11 // pred_check
        %p529 = pneg %p79
      $region14: #{tpu_custom_call.1} parent=11 // pred_check_branch
        %531 = sbr.rel (%p529) target = $region16
      $region15: #{tpu_custom_call.1} parent=11 // pred_region
        _
      $region16: #{tpu_custom_call.1} parent=11 // pred_fallthru
        _
      // Predicated region
      $region17: #{tpu_custom_call.1} parent=11 // pred_check
        %p532 = pneg %p100
      $region18: #{tpu_custom_call.1} parent=11 // pred_check_branch
        %534 = sbr.rel (%p532) target = $region20
      $region19: #{tpu_custom_call.1} parent=11 // pred_region
        _
      $region20: #{tpu_custom_call.1} parent=11 // pred_fallthru
        _
      // Predicated region
      $region21: #{tpu_custom_call.1} parent=11 // pred_check
        %p535 = pneg %p121
      $region22: #{tpu_custom_call.1} parent=11 // pred_check_branch
        %537 = sbr.rel (%p535) target = $region24
      $region23: #{tpu_custom_call.1} parent=11 // pred_region
        _
      $region24: #{tpu_custom_call.1} parent=11 // pred_fallthru
        _
      // Predicated region
      $region25: #{tpu_custom_call.1} parent=11 // pred_check
        %p538 = pneg %p142
      $region26: #{tpu_custom_call.1} parent=11 // pred_check_branch
        %540 = sbr.rel (%p538) target = $region28
      $region27: #{tpu_custom_call.1} parent=11 // pred_region
        _
      $region28: #{tpu_custom_call.1} parent=11 // pred_fallthru
        _
      // Predicated region
      $region29: #{tpu_custom_call.1} parent=11 // pred_check
        %p541 = pneg %p163
      $region30: #{tpu_custom_call.1} parent=11 // pred_check_branch
        %543 = sbr.rel (%p541) target = $region32
      $region31: #{tpu_custom_call.1} parent=11 // pred_region
        _
      $region32: #{tpu_custom_call.1} parent=11 // pred_fallthru
        _
      // Predicated region
      $region33: #{tpu_custom_call.1} parent=11 // pred_check
        %p544 = pneg %p184
      $region34: #{tpu_custom_call.1} parent=11 // pred_check_branch
        %546 = sbr.rel (%p544) target = $region36
      $region35: #{tpu_custom_call.1} parent=11 // pred_region
        _
      $region36: #{tpu_custom_call.1} parent=11 // pred_fallthru
        _
      // Predicated region
      $region37: #{tpu_custom_call.1} parent=11 // pred_check
        %p547 = pneg %p205
      $region38: #{tpu_custom_call.1} parent=11 // pred_check_branch
        %549 = sbr.rel (%p547) target = $region40
      $region39: #{tpu_custom_call.1} parent=11 // pred_region
        _
      $region40: #{tpu_custom_call.1} parent=11 // pred_fallthru
        _
      // Predicated region
      $region41: #{tpu_custom_call.1} parent=11 // pred_check
        %p550 = pneg %p226
      $region42: #{tpu_custom_call.1} parent=11 // pred_check_branch
        %552 = sbr.rel (%p550) target = $region44
      $region43: #{tpu_custom_call.1} parent=11 // pred_region
        _
      $region44: #{tpu_custom_call.1} parent=11 // pred_fallthru
        _
      // Predicated region
      $region45: #{tpu_custom_call.1} parent=11 // pred_check
        %p553 = pneg %p247
      $region46: #{tpu_custom_call.1} parent=11 // pred_check_branch
        %555 = sbr.rel (%p553) target = $region48
      $region47: #{tpu_custom_call.1} parent=11 // pred_region
        _
      $region48: #{tpu_custom_call.1} parent=11 // pred_fallthru
        _
      // Predicated region
      $region49: #{tpu_custom_call.1} parent=11 // pred_check
        %p556 = pneg %p268
      $region50: #{tpu_custom_call.1} parent=11 // pred_check_branch
        %558 = sbr.rel (%p556) target = $region52
      $region51: #{tpu_custom_call.1} parent=11 // pred_region
        _
      $region52: #{tpu_custom_call.1} parent=11 // pred_fallthru
        _
      // Predicated region
      $region53: #{tpu_custom_call.1} parent=11 // pred_check
        %p559 = pneg %p289
      $region54: #{tpu_custom_call.1} parent=11 // pred_check_branch
        %561 = sbr.rel (%p559) target = $region56
      $region55: #{tpu_custom_call.1} parent=11 // pred_region
        _
      $region56: #{tpu_custom_call.1} parent=11 // pred_fallthru
        _
      // Predicated region
      $region57: #{tpu_custom_call.1} parent=11 // pred_check
        %p562 = pneg %p310
      $region58: #{tpu_custom_call.1} parent=11 // pred_check_branch
        %564 = sbr.rel (%p562) target = $region60
      $region59: #{tpu_custom_call.1} parent=11 // pred_region
        _
      $region60: #{tpu_custom_call.1} parent=11 // pred_fallthru
        _
      // Predicated region
      $region61: #{tpu_custom_call.1} parent=11 // pred_check
        %p565 = pneg %p331
      $region62: #{tpu_custom_call.1} parent=11 // pred_check_branch
        %567 = sbr.rel (%p565) target = $region64
      $region63: #{tpu_custom_call.1} parent=11 // pred_region
        _
      $region64: #{tpu_custom_call.1} parent=11 // pred_fallthru
        _
      // Predicated region
      $region65: #{tpu_custom_call.1} parent=11 // pred_check
        %p568 = pneg %p352
      $region66: #{tpu_custom_call.1} parent=11 // pred_check_branch
        %570 = sbr.rel (%p568) target = $region68
      $region67: #{tpu_custom_call.1} parent=11 // pred_region
        _
      $region68: #{tpu_custom_call.1} parent=11 // pred_fallthru
        _
      // Predicated region
      $region69: #{tpu_custom_call.1} parent=11 // pred_check
        %p571 = pneg %p373
      $region70: #{tpu_custom_call.1} parent=11 // pred_check_branch
        %573 = sbr.rel (%p571) target = $region72
      $region71: #{tpu_custom_call.1} parent=11 // pred_region
        _
      $region72: #{tpu_custom_call.1} parent=11 // pred_fallthru
        _
      // Predicated region
      $region73: #{tpu_custom_call.1} parent=11 // pred_check
        %p574 = pneg %p394
      $region74: #{tpu_custom_call.1} parent=11 // pred_check_branch
        %576 = sbr.rel (%p574) target = $region76
      $region75: #{tpu_custom_call.1} parent=11 // pred_region
        _
      $region76: #{tpu_custom_call.1} parent=11 // pred_fallthru
        _
      // Predicated region
      $region77: #{tpu_custom_call.1} parent=11 // pred_check
        %p577 = pneg %p415
      $region78: #{tpu_custom_call.1} parent=11 // pred_check_branch
        %579 = sbr.rel (%p577) target = $region80
      $region79: #{tpu_custom_call.1} parent=11 // pred_region
        _
      $region80: #{tpu_custom_call.1} parent=11 // pred_fallthru
        _
      // Predicated region
      $region81: #{tpu_custom_call.1} parent=11 // pred_check
        %p580 = pneg %p436
      $region82: #{tpu_custom_call.1} parent=11 // pred_check_branch
        %582 = sbr.rel (%p580) target = $region84
      $region83: #{tpu_custom_call.1} parent=11 // pred_region
        _
      $region84: #{tpu_custom_call.1} parent=11 // pred_fallthru
        _
    $region12: #{tpu_custom_call.1} parent=5 // pred_fallthru
      _
    %p583 = scmp.lt.s32.totalorder %s32, 2
    // Predicated region
    $region85: #{tpu_custom_call.1} parent=5 // pred_check
      %p584 = pneg %p583
    $region86: #{tpu_custom_call.1} parent=5 // pred_check_branch
      %586 = sbr.rel (%p584) target = $region88
    $region87: #{tpu_custom_call.1} parent=5 // pred_region
      // Predicated region
      $region89: #{tpu_custom_call.1} parent=87 // pred_check
        %p587 = pneg %p52
      $region90: #{tpu_custom_call.1} parent=87 // pred_check_branch
        %589 = sbr.rel (%p587) target = $region92
      $region91: #{tpu_custom_call.1} parent=87 // pred_region
        %p590 = scmp.lt.s32.totalorder %s32, 1
        %s591 = scalar_select %p590, %s32, 1
        %s592 = smul.addr %s591, 8
        %s593 = scalar_lea.vmem %s0, %s592
      $region92: #{tpu_custom_call.1} parent=87 // pred_fallthru
        _
    $region88: #{tpu_custom_call.1} parent=5 // pred_fallthru
      _
    %p594 = scmp.le.s32.totalorder 1, %s32
    %p595 = scmp.lt.s32.totalorder %s32, 3
    %p596 = pnand %p594, %p595
    %p597 = pneg %p596
    // Predicated region
    $region93: #{tpu_custom_call.1} parent=5 // pred_check
      _
    $region94: #{tpu_custom_call.1} parent=5 // pred_check_branch
      %599 = sbr.rel (%p596) target = $region96
    $region95: #{tpu_custom_call.1} parent=5 // pred_region
      %s600 = ssub.s32 %s32, 1
      %p601 = scmp.lt.s32.totalorder %s37, 1
      %s602 = scalar_select %p601, %s37, 1
      %s603 = smul.addr %s602, 8
      %s604 = scalar_lea.vmem %s0, %s603
      %p605 = pneg %p58
      %p606 = pneg %p55
      %p607 = pneg %p79
      %p608 = pneg %p76
      %p609 = pneg %p100
      %p610 = pneg %p97
      %p611 = pneg %p121
      %p612 = pneg %p118
      %p613 = pneg %p142
      %p614 = pneg %p139
      %p615 = pneg %p163
      %p616 = pneg %p160
      %p617 = pneg %p184
      %p618 = pneg %p181
      %p619 = pneg %p205
      %p620 = pneg %p202
      %p621 = pneg %p226
      %p622 = pneg %p223
      %p623 = pneg %p247
      %p624 = pneg %p244
      %p625 = pneg %p268
      %p626 = pneg %p265
      %p627 = pneg %p289
      %p628 = pneg %p286
      %p629 = pneg %p310
      %p630 = pneg %p307
      %p631 = pneg %p331
      %p632 = pneg %p328
      %p633 = pneg %p352
      %p634 = pneg %p349
      %p635 = pneg %p373
      %p636 = pneg %p370
      %p637 = pneg %p394
      %p638 = pneg %p391
      %p639 = pneg %p415
      %p640 = pneg %p412
      %p641 = pneg %p436
      %p642 = pneg %p433
      %p643 = pneg %p462
      %p644 = pneg %p459
      %p645 = scmp.lt.s32.totalorder %s37, 1
      %s646 = scalar_select %p645, %s37, 1
      %s647 = smul.addr %s646, 8
      %s648 = scalar_lea.vmem %s19, %s647
      %p649 = pneg %p488
      %p650 = pneg %p485
      %p651 = scmp.lt.s32.totalorder %s37, 1
      %s652 = scalar_select %p651, %s37, 1
      %s653 = smul.addr %s652, 8
      %s654 = scalar_lea.vmem %s20, %s653
      %p655 = pneg %p514
      %p656 = pneg %p511
      %p657 = scmp.lt.s32.totalorder %s37, 1
      %s658 = scalar_select %p657, %s37, 1
      %s659 = smul.addr %s658, 8
      %s660 = scalar_lea.vmem %s21, %s659
      %p661 = scmp.lt.s32.totalorder %s37, 1
      %s662 = scalar_select %p661, %s37, 1
      %s663 = smul.addr %s662, 8
      %s664 = scalar_lea.vmem %s0, %s663
      %p665 = scmp.lt.s32.totalorder %s37, 1
      %s666 = scalar_select %p665, %s37, 1
      %s667 = smul.addr %s666, 8
      %s668 = scalar_lea.vmem %s19, %s667
      %p669 = scmp.lt.s32.totalorder %s37, 1
      %s670 = scalar_select %p669, %s37, 1
      %s671 = smul.addr %s670, 8
      %s672 = scalar_lea.vmem %s20, %s671
      %p673 = scmp.lt.s32.totalorder %s37, 1
      %s674 = scalar_select %p673, %s37, 1
      %s675 = smul.addr %s674, 8
      %s676 = scalar_lea.vmem %s21, %s675
      %v677 = vld [vmem:[%s664] sm:$0xff]
      %v678 = vld [vmem:[%s1] sm:$0xff]
      %v679 = vld [vmem:[%s1 + $0x8] sm:$0xff]
      %v680 = vld [vmem:[%s1 + $0x10] sm:$0xff]
      %v681 = vld [vmem:[%s1 + $0x18] sm:$0xff]
      %v682 = vld [vmem:[%s2] sm:$0x1]
      %v684 = vlaneseq
      %v685 = vshrl.u32 %v684, 7
      %v686 = vsub.s32 0, %v685
      %v687 = vrot.slane %v682, %v686
      %vm689 = vcmask 261120
      %v691 = vsel %vm689, %v677, 0
      %693 = vmatprep.subr.mxu0 0.0
      %694 = vmatpush1.msra.mxu0 %v678
      %695 = vmatprep.subr.mxu0 0.0
      %696 = vmatpush1.msra.mxu0 %v679
      %697 = vmatprep.subr.mxu0 0.0
      %698 = vmatpush1.msra.mxu0 %v680
      %699 = vmatprep.subr.mxu0 0.0
      %700 = vmatpush1.msra.mxu0 %v681
      %701 = vmatprep.subr.mxu0 0.0
      %702 = vmatpush1.msra.mxu0 0.0
      %703 = vmatprep.subr.mxu0 0.0
      %704 = vmatpush1.msra.mxu0 0.0
      %705 = vmatprep.subr.mxu0 0.0
      %706 = vmatpush1.msra.mxu0 0.0
      %707 = vmatprep.subr.mxu0 0.0
      %708 = vmatpush1.msra.mxu0 0.0
      %709 = vmatprep.subr.mxu0 0.0
      %710 = vmatpush1.msra.mxu0 0.0
      %711 = vmatprep.subr.mxu0 0.0
      %712 = vmatpush1.msra.mxu0 0.0
      %713 = vmatprep.subr.mxu0 0.0
      %714 = vmatpush1.msra.mxu0 0.0
      %715 = vmatprep.subr.mxu0 0.0
      %716 = vmatpush1.msra.mxu0 0.0
      %717 = vmatprep.subr.mxu0 0.0
      %718 = vmatpush1.msra.mxu0 0.0
      %719 = vmatprep.subr.mxu0 0.0
      %720 = vmatpush1.msra.mxu0 0.0
      %721 = vmatprep.subr.mxu0 0.0
      %722 = vmatpush1.msra.mxu0 0.0
      %723 = vmatprep.subr.mxu0 0.0
      %724 = vmatpush1.msra.mxu0 0.0
      %725 = vmatprep.subr.mxu0 0.0
      %726 = vmatpush1.msra.mxu0 0.0
      %727 = vmatprep.subr.mxu0 0.0
      %728 = vmatpush1.msra.mxu0 0.0
      %729 = vmatprep.subr.mxu0 0.0
      %730 = vmatpush1.msra.mxu0 0.0
      %731 = vmatprep.subr.mxu0 0.0
      %732 = vmatpush1.msra.mxu0 0.0
      %733 = vmatprep.subr.mxu0 0.0
      %734 = vmatpush1.msra.mxu0 0.0
      %735 = vmatprep.subr.mxu0 0.0
      %736 = vmatpush1.msra.mxu0 0.0
      %737 = vmatprep.subr.mxu0 0.0
      %738 = vmatpush1.msra.mxu0 0.0
      %739 = vmatprep.subr.mxu0 0.0
      %740 = vmatpush1.msra.mxu0 0.0
      %741 = vmatprep.subr.mxu0 0.0
      %742 = vmatpush1.msra.mxu0 0.0
      %743 = vmatprep.subr.mxu0 0.0
      %744 = vmatpush1.msra.mxu0 0.0
      %745 = vmatprep.subr.mxu0 0.0
      %746 = vmatpush1.msra.mxu0 0.0
      %747 = vmatprep.subr.mxu0 0.0
      %748 = vmatpush1.msra.mxu0 0.0
      %749 = vmatprep.subr.mxu0 0.0
      %750 = vmatpush1.msra.mxu0 0.0
      %751 = vmatprep.subr.mxu0 0.0
      %752 = vmatpush1.msra.mxu0 0.0
      %753 = vmatprep.subr.mxu0 0.0
      %754 = vmatpush1.msra.mxu0 0.0
      %755 = vmatprep.subr.mxu0 0.0
      %756 = vmatpush1.msra.mxu0 0.0
      %757 = vmatprep.mubr.f32.mxu0 0.0
      %758 = vmatmul.mubr.f32.gmra.mrb[0].mxu0 %v691
      %v759 = vpop.f32.mrb[0].mxu0
      %v760 = vadd.f32 %v687, %v759
      %v761 = vpop.f32.mrb[0].mxu0
      %762 = vdwg.mxu0
      %v763 = vld [vmem:[%s3] sm:$0x1]
      %v764 = vld [vmem:[%s4] sm:$0x1]
      %v765 = vsel %vm689, %v760, 0.0
      %766 = vadd.xlane.f32.xlu0 %v765
      %v767 = vpop.xlane.xlu0 %766
      %v768 = vrcp.pop 32.0
      %v769 = vmul.f32 %v767, %v768
      %v770 = vsub.f32 %v760, %v769
      %v771 = vmul.f32 %v770, %v770
      %v772 = vsel %vm689, %v771, 0.0
      %773 = vadd.xlane.f32.xlu0 %v772
      %v774 = vpop.xlane.xlu0 %773
      %v775 = vmul.f32 %v774, %v768
      %v776 = vadd.f32 %v775, 1e-05
      %v777 = vrsqrt.pop %v776
      %v778 = vmul.f32 %v770, %v777
      %v780 = vlaneseq
      %v781 = vshrl.u32 %v780, 7
      %v782 = vsub.s32 0, %v781
      %v783 = vrot.slane %v763, %v782
      %v785 = vmul.f32 %v778, %v783
      %v787 = vlaneseq
      %v788 = vshrl.u32 %v787, 7
      %v789 = vsub.s32 0, %v788
      %v790 = vrot.slane %v764, %v789
      %v792 = vadd.f32 %v785, %v790
      %v793 = vmul.f32 %v792, 0.5
      %v794 = vrcp.pop 1.4142135
      %v795 = vmul.f32 %v792, %v794
      %v796 = verf.f32.pop %v795
      %v797 = vadd.f32 %v796, 1.0
      %v798 = vmul.f32 %v793, %v797
      %v799 = vld [vmem:[%s5] sm:$0xff]
      %v800 = vld [vmem:[%s5 + $0x8] sm:$0xff]
      %v801 = vld [vmem:[%s5 + $0x10] sm:$0xff]
      %v802 = vld [vmem:[%s5 + $0x18] sm:$0xff]
      %v803 = vld [vmem:[%s6] sm:$0x1]
      %v805 = vlaneseq
      %v806 = vshrl.u32 %v805, 7
      %v807 = vsub.s32 0, %v806
      %v808 = vrot.slane %v803, %v807
      %v811 = vsel %vm689, %v798, 0
      %813 = vmatprep.subr.mxu0 0.0
      %814 = vmatpush1.msra.mxu0 %v799
      %815 = vmatprep.subr.mxu0 0.0
      %816 = vmatpush1.msra.mxu0 %v800
      %817 = vmatprep.subr.mxu0 0.0
      %818 = vmatpush1.msra.mxu0 %v801
      %819 = vmatprep.subr.mxu0 0.0
      %820 = vmatpush1.msra.mxu0 %v802
      %821 = vmatprep.subr.mxu0 0.0
      %822 = vmatpush1.msra.mxu0 0.0
      %823 = vmatprep.subr.mxu0 0.0
      %824 = vmatpush1.msra.mxu0 0.0
      %825 = vmatprep.subr.mxu0 0.0
      %826 = vmatpush1.msra.mxu0 0.0
      %827 = vmatprep.subr.mxu0 0.0
      %828 = vmatpush1.msra.mxu0 0.0
      %829 = vmatprep.subr.mxu0 0.0
      %830 = vmatpush1.msra.mxu0 0.0
      %831 = vmatprep.subr.mxu0 0.0
      %832 = vmatpush1.msra.mxu0 0.0
      %833 = vmatprep.subr.mxu0 0.0
      %834 = vmatpush1.msra.mxu0 0.0
      %835 = vmatprep.subr.mxu0 0.0
      %836 = vmatpush1.msra.mxu0 0.0
      %837 = vmatprep.subr.mxu0 0.0
      %838 = vmatpush1.msra.mxu0 0.0
      %839 = vmatprep.subr.mxu0 0.0
      %840 = vmatpush1.msra.mxu0 0.0
      %841 = vmatprep.subr.mxu0 0.0
      %842 = vmatpush1.msra.mxu0 0.0
      %843 = vmatprep.subr.mxu0 0.0
      %844 = vmatpush1.msra.mxu0 0.0
      %845 = vmatprep.subr.mxu0 0.0
      %846 = vmatpush1.msra.mxu0 0.0
      %847 = vmatprep.subr.mxu0 0.0
      %848 = vmatpush1.msra.mxu0 0.0
      %849 = vmatprep.subr.mxu0 0.0
      %850 = vmatpush1.msra.mxu0 0.0
      %851 = vmatprep.subr.mxu0 0.0
      %852 = vmatpush1.msra.mxu0 0.0
      %853 = vmatprep.subr.mxu0 0.0
      %854 = vmatpush1.msra.mxu0 0.0
      %855 = vmatprep.subr.mxu0 0.0
      %856 = vmatpush1.msra.mxu0 0.0
      %857 = vmatprep.subr.mxu0 0.0
      %858 = vmatpush1.msra.mxu0 0.0
      %859 = vmatprep.subr.mxu0 0.0
      %860 = vmatpush1.msra.mxu0 0.0
      %861 = vmatprep.subr.mxu0 0.0
      %862 = vmatpush1.msra.mxu0 0.0
      %863 = vmatprep.subr.mxu0 0.0
      %864 = vmatpush1.msra.mxu0 0.0
      %865 = vmatprep.subr.mxu0 0.0
      %866 = vmatpush1.msra.mxu0 0.0
      %867 = vmatprep.subr.mxu0 0.0
      %868 = vmatpush1.msra.mxu0 0.0
      %869 = vmatprep.subr.mxu0 0.0
      %870 = vmatpush1.msra.mxu0 0.0
      %871 = vmatprep.subr.mxu0 0.0
      %872 = vmatpush1.msra.mxu0 0.0
      %873 = vmatprep.subr.mxu0 0.0
      %874 = vmatpush1.msra.mxu0 0.0
      %875 = vmatprep.subr.mxu0 0.0
      %876 = vmatpush1.msra.mxu0 0.0
      %877 = vmatprep.mubr.f32.mxu0 0.0
      %878 = vmatmul.mubr.f32.gmra.mrb[0].mxu0 %v811
      %v879 = vpop.f32.mrb[0].mxu0
      %v880 = vadd.f32 %v808, %v879
      %v881 = vpop.f32.mrb[0].mxu0
      %882 = vdwg.mxu0
      %v883 = vmul.f32 %v880, 0.5
      %v884 = vmul.f32 %v880, %v794
      %v885 = verf.f32.pop %v884
      %v886 = vadd.f32 %v885, 1.0
      %v887 = vmul.f32 %v883, %v886
      %v888 = vld [vmem:[%s7] sm:$0x1]
      %v890 = vlaneseq
      %v891 = vshrl.u32 %v890, 7
      %v892 = vsub.s32 0, %v891
      %v893 = vrot.slane %v888, %v892
      %v895 = vmul.f32 %v887, %v893
      %vm896 = vcmask 130048
      %v897 = vsel %vm896, %v895, 0.0
      %898 = vadd.xlane.f32.xlu0 %v897
      %v899 = vpop.xlane.xlu0 %898
      %v900 = vld [vmem:[#allocation2] sm:$0x1]
      %v902 = vlaneseq
      %v903 = vshrl.u32 %v902, 7
      %v904 = vsub.s32 0, %v903
      %v905 = vrot.slane %v900, %v904
      %v907 = vadd.f32 %v899, %v905
      %v908 = vld [vmem:[%s9] sm:$0x1]
      %v909 = vld [vmem:[%s10] sm:$0x1]
      %911 = vrot.lane.b32.xlu0 %v760, 96
      %v912 = vpop.permute.xlu0 %911
      %v914 = vsel %vm689, %v912, 0.0
      %915 = vadd.xlane.f32.xlu0 %v914
      %v916 = vpop.xlane.xlu0 %915
      %v917 = vmul.f32 %v916, %v768
      %v918 = vsub.f32 %v760, %v917
      %v919 = vmul.f32 %v918, %v918
      %921 = vrot.lane.b32.xlu0 %v919, 96
      %v922 = vpop.permute.xlu0 %921
      %v924 = vsel %vm689, %v922, 0.0
      %925 = vadd.xlane.f32.xlu0 %v924
      %v926 = vpop.xlane.xlu0 %925
      %v927 = vmul.f32 %v926, %v768
      %v928 = vadd.f32 %v927, 1e-05
      %v929 = vrsqrt.pop %v928
      %v930 = vmul.f32 %v918, %v929
      %v932 = vlaneseq
      %v933 = vshrl.u32 %v932, 7
      %v934 = vsub.s32 0, %v933
      %v935 = vrot.slane %v908, %v934
      %936 = vrot.lane.b32.xlu0 %v935, 32
      %v937 = vpop.permute.xlu0 %936
      %v939 = vmul.f32 %v930, %v937
      %v941 = vlaneseq
      %v942 = vshrl.u32 %v941, 7
      %v943 = vsub.s32 0, %v942
      %v944 = vrot.slane %v909, %v943
      %945 = vrot.lane.b32.xlu0 %v944, 32
      %v946 = vpop.permute.xlu0 %945
      %v948 = vadd.f32 %v939, %v946
      %v949 = vmul.f32 %v948, 0.5
      %v950 = vmul.f32 %v948, %v794
      %v951 = verf.f32.pop %v950
      %v952 = vadd.f32 %v951, 1.0
      %v953 = vmul.f32 %v949, %v952
      %v954 = vld [vmem:[%s11] sm:$0xff]
      %v955 = vld [vmem:[%s11 + $0x8] sm:$0xff]
      %v956 = vld [vmem:[%s11 + $0x10] sm:$0xff]
      %v957 = vld [vmem:[%s11 + $0x18] sm:$0xff]
      %v958 = vld [vmem:[%s12] sm:$0x1]
      %v960 = vlaneseq
      %v961 = vshrl.u32 %v960, 7
      %v962 = vsub.s32 0, %v961
      %v963 = vrot.slane %v958, %v962
      %966 = vrot.lane.b32.xlu0 %v953, 96
      %v967 = vpop.permute.xlu0 %966
      %v968 = vsel %vm689, %v967, 0
      %970 = vmatprep.subr.mxu0 0.0
      %971 = vmatpush1.msra.mxu0 %v954
      %972 = vmatprep.subr.mxu0 0.0
      %973 = vmatpush1.msra.mxu0 %v955
      %974 = vmatprep.subr.mxu0 0.0
      %975 = vmatpush1.msra.mxu0 %v956
      %976 = vmatprep.subr.mxu0 0.0
      %977 = vmatpush1.msra.mxu0 %v957
      %978 = vmatprep.subr.mxu0 0.0
      %979 = vmatpush1.msra.mxu0 0.0
      %980 = vmatprep.subr.mxu0 0.0
      %981 = vmatpush1.msra.mxu0 0.0
      %982 = vmatprep.subr.mxu0 0.0
      %983 = vmatpush1.msra.mxu0 0.0
      %984 = vmatprep.subr.mxu0 0.0
      %985 = vmatpush1.msra.mxu0 0.0
      %986 = vmatprep.subr.mxu0 0.0
      %987 = vmatpush1.msra.mxu0 0.0
      %988 = vmatprep.subr.mxu0 0.0
      %989 = vmatpush1.msra.mxu0 0.0
      %990 = vmatprep.subr.mxu0 0.0
      %991 = vmatpush1.msra.mxu0 0.0
      %992 = vmatprep.subr.mxu0 0.0
      %993 = vmatpush1.msra.mxu0 0.0
      %994 = vmatprep.subr.mxu0 0.0
      %995 = vmatpush1.msra.mxu0 0.0
      %996 = vmatprep.subr.mxu0 0.0
      %997 = vmatpush1.msra.mxu0 0.0
      %998 = vmatprep.subr.mxu0 0.0
      %999 = vmatpush1.msra.mxu0 0.0
      %1000 = vmatprep.subr.mxu0 0.0
      %1001 = vmatpush1.msra.mxu0 0.0
      %1002 = vmatprep.subr.mxu0 0.0
      %1003 = vmatpush1.msra.mxu0 0.0
      %1004 = vmatprep.subr.mxu0 0.0
      %1005 = vmatpush1.msra.mxu0 0.0
      %1006 = vmatprep.subr.mxu0 0.0
      %1007 = vmatpush1.msra.mxu0 0.0
      %1008 = vmatprep.subr.mxu0 0.0
      %1009 = vmatpush1.msra.mxu0 0.0
      %1010 = vmatprep.subr.mxu0 0.0
      %1011 = vmatpush1.msra.mxu0 0.0
      %1012 = vmatprep.subr.mxu0 0.0
      %1013 = vmatpush1.msra.mxu0 0.0
      %1014 = vmatprep.subr.mxu0 0.0
      %1015 = vmatpush1.msra.mxu0 0.0
      %1016 = vmatprep.subr.mxu0 0.0
      %1017 = vmatpush1.msra.mxu0 0.0
      %1018 = vmatprep.subr.mxu0 0.0
      %1019 = vmatpush1.msra.mxu0 0.0
      %1020 = vmatprep.subr.mxu0 0.0
      %1021 = vmatpush1.msra.mxu0 0.0
      %1022 = vmatprep.subr.mxu0 0.0
      %1023 = vmatpush1.msra.mxu0 0.0
      %1024 = vmatprep.subr.mxu0 0.0
      %1025 = vmatpush1.msra.mxu0 0.0
      %1026 = vmatprep.subr.mxu0 0.0
      %1027 = vmatpush1.msra.mxu0 0.0
      %1028 = vmatprep.subr.mxu0 0.0
      %1029 = vmatpush1.msra.mxu0 0.0
      %1030 = vmatprep.subr.mxu0 0.0
      %1031 = vmatpush1.msra.mxu0 0.0
      %1032 = vmatprep.subr.mxu0 0.0
      %1033 = vmatpush1.msra.mxu0 0.0
      %1034 = vmatprep.mubr.f32.mxu0 0.0
      %1035 = vmatmul.mubr.f32.gmra.mrb[0].mxu0 %v968
      %v1036 = vpop.f32.mrb[0].mxu0
      %v1037 = vadd.f32 %v963, %v1036
      %v1038 = vpop.f32.mrb[0].mxu0
      %1039 = vdwg.mxu0
      %vm1040 = vcmask 31744
      %v1041 = vsel %vm1040, %v1037, -inf
      %1042 = vmax.xlane.f32.xlu0 %v1041
      %v1043 = vpop.xlane.xlu0 %1042
      %v1044 = vsub.f32 %v1037, %v1043
      %v1045 = vmul.f32 %v1044, 1.442695
      %v1046 = vpow.pop %v1045
      %v1047 = vsel %vm1040, %v1046, 0.0
      %1048 = vadd.xlane.f32.xlu0 %v1047
      %v1049 = vpop.xlane.xlu0 %1048
      %v1050 = vrcp.pop %v1049
      %v1051 = vmul.f32 %v1046, %v1050
      %1052 = vst.msk [vmem:[%s676] sm:$0xff] %vm1040, %v1051
      %v1053 = vmul.f32 %v760, 0.5
      %v1054 = vmul.f32 %v760, %v794
      %v1055 = verf.f32.pop %v1054
      %v1056 = vadd.f32 %v1055, 1.0
      %v1057 = vmul.f32 %v1053, %v1056
      %v1058 = vld [vmem:[%s17] sm:$0x1]
      %v1060 = vlaneseq
      %v1061 = vshrl.u32 %v1060, 7
      %v1062 = vsub.s32 0, %v1061
      %v1063 = vrot.slane %v1058, %v1062
      %1064 = vrot.lane.b32.xlu0 %v1063, 64
      %v1065 = vpop.permute.xlu0 %1064
      %v1067 = vmul.f32 %v1057, %v1065
      %1069 = vrot.lane.b32.xlu0 %v1067, 64
      %v1070 = vpop.permute.xlu0 %1069
      %v1072 = vsel %vm896, %v1070, 0.0
      %1073 = vadd.xlane.f32.xlu0 %v1072
      %v1074 = vpop.xlane.xlu0 %1073
      %v1075 = vld [vmem:[#allocation3] sm:$0x1]
      %v1077 = vlaneseq
      %v1078 = vshrl.u32 %v1077, 7
      %v1079 = vsub.s32 0, %v1078
      %v1080 = vrot.slane %v1075, %v1079
      %v1082 = vadd.f32 %v1074, %v1080
      %v1083 = vmul.f32 %v1082, 1.442695
      %v1084 = vpow.pop %v1083
      %v1085 = vld [vmem:[%s13] sm:$0x1]
      %v1086 = vld [vmem:[%s14] sm:$0x1]
      %1087 = vrot.lane.b32.xlu0 %v760, 48
      %v1088 = vpop.permute.xlu0 %1087
      %v1090 = vsel %vm896, %v1088, 0.0
      %1091 = vadd.xlane.f32.xlu0 %v1090
      %v1092 = vpop.xlane.xlu0 %1091
      %v1093 = vrcp.pop 16.0
      %v1094 = vmul.f32 %v1092, %v1093
      %v1095 = vsub.f32 %v760, %v1094
      %v1096 = vmul.f32 %v1095, %v1095
      %1098 = vrot.lane.b32.xlu0 %v1096, 48
      %v1099 = vpop.permute.xlu0 %1098
      %v1101 = vsel %vm896, %v1099, 0.0
      %1102 = vadd.xlane.f32.xlu0 %v1101
      %v1103 = vpop.xlane.xlu0 %1102
      %v1104 = vmul.f32 %v1103, %v1093
      %v1105 = vadd.f32 %v1104, 1e-05
      %v1106 = vrsqrt.pop %v1105
      %v1107 = vmul.f32 %v1095, %v1106
      %v1108 = vlaneseq
      %v1109 = vshrl.u32 %v1108, 7
      %v1110 = vsub.s32 0, %v1109
      %v1111 = vrot.slane %v1085, %v1110
      %1113 = vrot.lane.b32.xlu0 %v1111, 80
      %v1114 = vpop.permute.xlu0 %1113
      %v1116 = vmul.f32 %v1107, %v1114
      %v1117 = vlaneseq
      %v1118 = vshrl.u32 %v1117, 7
      %v1119 = vsub.s32 0, %v1118
      %v1120 = vrot.slane %v1086, %v1119
      %1122 = vrot.lane.b32.xlu0 %v1120, 80
      %v1123 = vpop.permute.xlu0 %1122
      %v1125 = vadd.f32 %v1116, %v1123
      %v1126 = vmul.f32 %v1125, 0.5
      %v1127 = vmul.f32 %v1125, %v794
      %v1128 = verf.f32.pop %v1127
      %v1129 = vadd.f32 %v1128, 1.0
      %v1130 = vmul.f32 %v1126, %v1129
      %v1131 = vld [vmem:[%s15] sm:$0x1]
      %v1132 = vlaneseq
      %v1133 = vshrl.u32 %v1132, 7
      %v1134 = vsub.s32 0, %v1133
      %v1135 = vrot.slane %v1131, %v1134
      %1137 = vrot.lane.b32.xlu0 %v1135, 80
      %v1138 = vpop.permute.xlu0 %1137
      %v1140 = vmul.f32 %v1130, %v1138
      %1142 = vrot.lane.b32.xlu0 %v1140, 48
      %v1143 = vpop.permute.xlu0 %1142
      %v1145 = vsel %vm896, %v1143, 0.0
      %1146 = vadd.xlane.f32.xlu0 %v1145
      %v1147 = vpop.xlane.xlu0 %1146
      %v1148 = vld [vmem:[%s16] sm:$0x1]
      %v1150 = vlaneseq
      %v1151 = vshrl.u32 %v1150, 7
      %v1152 = vsub.s32 0, %v1151
      %v1153 = vrot.slane %v1148, %v1152
      %v1155 = vadd.f32 %v1147, %v1153
      %v1156 = vadd.f32 %v907, %v1155
      %v1157 = vld [vmem:[%s13 + $0x1] sm:$0x1]
      %v1158 = vld [vmem:[%s14 + $0x1] sm:$0x1]
      %1159 = vrot.lane.b32.xlu0 %v760, 32
      %v1160 = vpop.permute.xlu0 %1159
      %v1162 = vsel %vm896, %v1160, 0.0
      %1163 = vadd.xlane.f32.xlu0 %v1162
      %v1164 = vpop.xlane.xlu0 %1163
      %v1165 = vmul.f32 %v1164, %v1093
      %v1166 = vsub.f32 %v760, %v1165
      %v1167 = vmul.f32 %v1166, %v1166
      %1169 = vrot.lane.b32.xlu0 %v1167, 32
      %v1170 = vpop.permute.xlu0 %1169
      %v1172 = vsel %vm896, %v1170, 0.0
      %1173 = vadd.xlane.f32.xlu0 %v1172
      %v1174 = vpop.xlane.xlu0 %1173
      %v1175 = vmul.f32 %v1174, %v1093
      %v1176 = vadd.f32 %v1175, 1e-05
      %v1177 = vrsqrt.pop %v1176
      %v1178 = vmul.f32 %v1166, %v1177
      %v1179 = vlaneseq
      %v1180 = vshrl.u32 %v1179, 7
      %v1181 = vsub.s32 0, %v1180
      %v1182 = vrot.slane %v1157, %v1181
      %1184 = vrot.lane.b32.xlu0 %v1182, 96
      %v1185 = vpop.permute.xlu0 %1184
      %v1187 = vmul.f32 %v1178, %v1185
      %v1188 = vlaneseq
      %v1189 = vshrl.u32 %v1188, 7
      %v1190 = vsub.s32 0, %v1189
      %v1191 = vrot.slane %v1158, %v1190
      %1193 = vrot.lane.b32.xlu0 %v1191, 96
      %v1194 = vpop.permute.xlu0 %1193
      %v1196 = vadd.f32 %v1187, %v1194
      %v1197 = vmul.f32 %v1196, 0.5
      %v1198 = vmul.f32 %v1196, %v794
      %v1199 = verf.f32.pop %v1198
      %v1200 = vadd.f32 %v1199, 1.0
      %v1201 = vmul.f32 %v1197, %v1200
      %v1202 = vld [vmem:[%s15 + $0x1] sm:$0x1]
      %v1203 = vlaneseq
      %v1204 = vshrl.u32 %v1203, 7
      %v1205 = vsub.s32 0, %v1204
      %v1206 = vrot.slane %v1202, %v1205
      %1208 = vrot.lane.b32.xlu0 %v1206, 96
      %v1209 = vpop.permute.xlu0 %1208
      %v1211 = vmul.f32 %v1201, %v1209
      %1213 = vrot.lane.b32.xlu0 %v1211, 32
      %v1214 = vpop.permute.xlu0 %1213
      %v1216 = vsel %vm896, %v1214, 0.0
      %1217 = vadd.xlane.f32.xlu0 %v1216
      %v1218 = vpop.xlane.xlu0 %1217
      %v1219 = vadd.f32 %v1218, %v1153
      %1221 = vrot.lane.b32.xlu0 %v1219, 127
      %v1222 = vpop.permute.xlu0 %1221
      %v1224 = vadd.f32 %v907, %v1222
      %v1225 = vld [vmem:[%s13 + $0x2] sm:$0x1]
      %v1226 = vld [vmem:[%s14 + $0x2] sm:$0x1]
      %1227 = vrot.lane.b32.xlu0 %v760, 16
      %v1228 = vpop.permute.xlu0 %1227
      %v1230 = vsel %vm896, %v1228, 0.0
      %1231 = vadd.xlane.f32.xlu0 %v1230
      %v1232 = vpop.xlane.xlu0 %1231
      %v1233 = vmul.f32 %v1232, %v1093
      %v1234 = vsub.f32 %v760, %v1233
      %v1235 = vmul.f32 %v1234, %v1234
      %1237 = vrot.lane.b32.xlu0 %v1235, 16
      %v1238 = vpop.permute.xlu0 %1237
      %v1240 = vsel %vm896, %v1238, 0.0
      %1241 = vadd.xlane.f32.xlu0 %v1240
      %v1242 = vpop.xlane.xlu0 %1241
      %v1243 = vmul.f32 %v1242, %v1093
      %v1244 = vadd.f32 %v1243, 1e-05
      %v1245 = vrsqrt.pop %v1244
      %v1246 = vmul.f32 %v1234, %v1245
      %v1247 = vlaneseq
      %v1248 = vshrl.u32 %v1247, 7
      %v1249 = vsub.s32 0, %v1248
      %v1250 = vrot.slane %v1225, %v1249
      %1252 = vrot.lane.b32.xlu0 %v1250, 112
      %v1253 = vpop.permute.xlu0 %1252
      %v1255 = vmul.f32 %v1246, %v1253
      %v1256 = vlaneseq
      %v1257 = vshrl.u32 %v1256, 7
      %v1258 = vsub.s32 0, %v1257
      %v1259 = vrot.slane %v1226, %v1258
      %1261 = vrot.lane.b32.xlu0 %v1259, 112
      %v1262 = vpop.permute.xlu0 %1261
      %v1264 = vadd.f32 %v1255, %v1262
      %v1265 = vmul.f32 %v1264, 0.5
      %v1266 = vmul.f32 %v1264, %v794
      %v1267 = verf.f32.pop %v1266
      %v1268 = vadd.f32 %v1267, 1.0
      %v1269 = vmul.f32 %v1265, %v1268
      %v1270 = vld [vmem:[%s15 + $0x2] sm:$0x1]
      %v1271 = vlaneseq
      %v1272 = vshrl.u32 %v1271, 7
      %v1273 = vsub.s32 0, %v1272
      %v1274 = vrot.slane %v1270, %v1273
      %1276 = vrot.lane.b32.xlu0 %v1274, 112
      %v1277 = vpop.permute.xlu0 %1276
      %v1279 = vmul.f32 %v1269, %v1277
      %1281 = vrot.lane.b32.xlu0 %v1279, 16
      %v1282 = vpop.permute.xlu0 %1281
      %v1284 = vsel %vm896, %v1282, 0.0
      %1285 = vadd.xlane.f32.xlu0 %v1284
      %v1286 = vpop.xlane.xlu0 %1285
      %v1287 = vadd.f32 %v1286, %v1153
      %1289 = vrot.lane.b32.xlu0 %v1287, 126
      %v1290 = vpop.permute.xlu0 %1289
      %v1292 = vadd.f32 %v907, %v1290
      %1294 = vrot.lane.b32.xlu0 %v1156, 1
      %v1295 = vpop.permute.xlu0 %1294
      %1298 = vrot.lane.b32.xlu0 %v1224, 2
      %v1299 = vpop.permute.xlu0 %1298
      %1302 = vrot.lane.b32.xlu0 %v1292, 3
      %v1303 = vpop.permute.xlu0 %1302
      %vm1305 = vcmask 7168
      %v1306 = vsel %vm1305, %v907, %v1295
      %vm1307 = vcmask 15360
      %v1308 = vsel %vm1307, %v1306, %v1299
      %vm1309 = vcmask 23552
      %v1310 = vsel %vm1309, %v1308, %v1303
      %1311 = vst.msk [vmem:[%s668] sm:$0xff] %vm1040, %v1310
      %1313 = vset.pattern.permute.xlu0 0
      %1314 = vperm.xlu0 %1313, %v1084
      %v1315 = vpop.permute.xlu0 %1314
      %1317 = vst.msk [vmem:[%s672] sm:$0xff] %vm1040, %v1315
      %p1318 = scmp.lt.s32.totalorder %s37, 1
      %s1319 = scalar_select %p1318, %s37, 1
      %s1320 = smul.addr %s1319, 8
      %s1321 = scalar_lea.vmem %s19, %s1320
      %p1322 = scmp.lt.s32.totalorder %s37, 1
      %s1323 = scalar_select %p1322, %s37, 1
      %s1324 = smul.addr %s1323, 8
      %s1325 = scalar_lea.vmem %s20, %s1324
      %p1326 = scmp.lt.s32.totalorder %s37, 1
      %s1327 = scalar_select %p1326, %s37, 1
      %s1328 = smul.addr %s1327, 8
      %s1329 = scalar_lea.vmem %s21, %s1328
      // Predicated region
      $region97: #{tpu_custom_call.1} parent=95 // pred_check
        %p1330 = pneg %p459
      $region98: #{tpu_custom_call.1} parent=95 // pred_check_branch
        %1332 = sbr.rel (%p1330) target = $region100
      $region99: #{tpu_custom_call.1} parent=95 // pred_region
        _
      $region100: #{tpu_custom_call.1} parent=95 // pred_fallthru
        _
      // Predicated region
      $region101: #{tpu_custom_call.1} parent=95 // pred_check
        %p1333 = pneg %p485
      $region102: #{tpu_custom_call.1} parent=95 // pred_check_branch
        %1335 = sbr.rel (%p1333) target = $region104
      $region103: #{tpu_custom_call.1} parent=95 // pred_region
        _
      $region104: #{tpu_custom_call.1} parent=95 // pred_fallthru
        _
      // Predicated region
      $region105: #{tpu_custom_call.1} parent=95 // pred_check
        %p1336 = pneg %p511
      $region106: #{tpu_custom_call.1} parent=95 // pred_check_branch
        %1338 = sbr.rel (%p1336) target = $region108
      $region107: #{tpu_custom_call.1} parent=95 // pred_region
        _
      $region108: #{tpu_custom_call.1} parent=95 // pred_fallthru
        _
    $region96: #{tpu_custom_call.1} parent=5 // pred_fallthru
      _
    %p1339 = scmp.le.s32.totalorder 2, %s32
    // Predicated region
    $region109: #{tpu_custom_call.1} parent=5 // pred_check
      %p1340 = pneg %p1339
    $region110: #{tpu_custom_call.1} parent=5 // pred_check_branch
      %1342 = sbr.rel (%p1340) target = $region112
    $region111: #{tpu_custom_call.1} parent=5 // pred_region
      %s1343 = ssub.s32 %s32, 2
      // Predicated region
      $region113: #{tpu_custom_call.1} parent=111 // pred_check
        %p1344 = pneg %p465
      $region114: #{tpu_custom_call.1} parent=111 // pred_check_branch
        %1346 = sbr.rel (%p1344) target = $region116
      $region115: #{tpu_custom_call.1} parent=111 // pred_region
        %p1347 = scmp.lt.s32.totalorder %s38, 1
        %s1348 = scalar_select %p1347, %s38, 1
        %s1349 = smul.addr %s1348, 8
        %s1350 = scalar_lea.vmem %s19, %s1349
      $region116: #{tpu_custom_call.1} parent=111 // pred_fallthru
        _
      // Predicated region
      $region117: #{tpu_custom_call.1} parent=111 // pred_check
        %p1351 = pneg %p491
      $region118: #{tpu_custom_call.1} parent=111 // pred_check_branch
        %1353 = sbr.rel (%p1351) target = $region120
      $region119: #{tpu_custom_call.1} parent=111 // pred_region
        %p1354 = scmp.lt.s32.totalorder %s38, 1
        %s1355 = scalar_select %p1354, %s38, 1
        %s1356 = smul.addr %s1355, 8
        %s1357 = scalar_lea.vmem %s20, %s1356
      $region120: #{tpu_custom_call.1} parent=111 // pred_fallthru
        _
      // Predicated region
      $region121: #{tpu_custom_call.1} parent=111 // pred_check
        %p1358 = pneg %p517
      $region122: #{tpu_custom_call.1} parent=111 // pred_check_branch
        %1360 = sbr.rel (%p1358) target = $region124
      $region123: #{tpu_custom_call.1} parent=111 // pred_region
        %p1361 = scmp.lt.s32.totalorder %s38, 1
        %s1362 = scalar_select %p1361, %s38, 1
        %s1363 = smul.addr %s1362, 8
        %s1364 = scalar_lea.vmem %s21, %s1363
      $region124: #{tpu_custom_call.1} parent=111 // pred_fallthru
        _
    $region112: #{tpu_custom_call.1} parent=5 // pred_fallthru
      _
  $region6: #{tpu_custom_call.1} parent=0 // loop_footer
    %s36 = sadd.s32 1, %s32
  $region7: #{tpu_custom_call.1} parent=0 // loop_footer_branch
    %31 = sbr.rel target = $region3
  $region8: #{tpu_custom_call.1} parent=0 // loop_exit
    _

</llo_original>
